<compile_context>
chip_gen: v7x
topology: tpu7x:2x2x1
jax: 0.10.0
libtpu: 0.0.40
codegen_flags: <defaults>
</compile_context>

<pallas_src>
import functools
import math

import jax
import jax.numpy as jnp
from jax.experimental import pallas as pl
from jax.experimental.pallas import tpu as pltpu


# ----------------------------------------------------------------------------
# small helpers
# ----------------------------------------------------------------------------
def _round_up(a, b):
    return ((a + b - 1) // b) * b


def _lcm(a, b):
    return a * b // math.gcd(a, b)


def _largest_divisor_le(n, cap):
    for d in range(min(n, cap), 0, -1):
        if n % d == 0:
            return d
    return 1


def _ln(x, g, b, eps=1e-5):
    """LayerNorm over the last axis (PyTorch nn.LayerNorm semantics)."""
    m = jnp.mean(x, axis=-1, keepdims=True)
    xc = x - m
    v = jnp.mean(xc * xc, axis=-1, keepdims=True)
    return xc * jax.lax.rsqrt(v + eps) * g + b


# ----------------------------------------------------------------------------
# single-buffering capability probe (pipeline_mode=pl.Buffered(1))
# ----------------------------------------------------------------------------
_SINGLE_BUFFER_OK = None


def _probe_single_buffer():
    """Run a tiny pallas_call to verify pl.Buffered(1) works end-to-end."""
    def _k(x_ref, o_ref):
        o_ref[...] = x_ref[...]
    try:
        spec = pl.BlockSpec((8, 128), lambda i: (0, 0),
                            pipeline_mode=pl.Buffered(1))
        x = jnp.zeros((8, 128), jnp.float32)
        out = pl.pallas_call(
            _k,
            out_shape=jax.ShapeDtypeStruct((8, 128), jnp.float32),
            grid=(2,),
            in_specs=[spec],
            out_specs=pl.BlockSpec((8, 128), lambda i: (0, 0)),
        )(x)
        jax.block_until_ready(out)
        return True
    except Exception:
        return False


def _const_spec(block_shape, index_map):
    """BlockSpec for an input whose block index never changes: single-buffer
    it (halves its VMEM footprint) when the runtime supports Buffered(1)."""
    global _SINGLE_BUFFER_OK
    if _SINGLE_BUFFER_OK is None:
        _SINGLE_BUFFER_OK = _probe_single_buffer()
    if _SINGLE_BUFFER_OK:
        return pl.BlockSpec(block_shape, index_map,
                            pipeline_mode=pl.Buffered(1))
    return pl.BlockSpec(block_shape, index_map)


# ----------------------------------------------------------------------------
# Kernel A: conv feature aggregation (tfa + cfa) + three LayerNorms
# ----------------------------------------------------------------------------
def _feature_agg_kernel(xc_ref, xh_ref, w_ref, prm_ref, o_ref, *, ts, Bp):
    # xc_ref : (ts*Bp, E)  f32   current seq tile (rows = (seq, batch) pairs)
    # xh_ref : (8*Bp, E)   f32   right halo (next 8 seq positions)
    # w_ref  : (8*E, 2*E)  bf16  fused tap bank, cols [0:E]=tfa, [E:2E]=cfa
    # prm_ref: (8, E)      f32   [b_tfa, b_cfa, g_tfa, be_tfa, g_cfa, be_cfa, g_f, be_f]
    # o_ref  : (ts*Bp, E)  f32   aggregated + normalized features
    E = o_ref.shape[-1]
    rows = ts * Bp
    # load tile + halo once, derive the 8 shifted views from the loaded value
    win = jnp.concatenate([xc_ref[...], xh_ref[...]], axis=0)   # ((ts+8)*Bp, E)
    xin = jnp.concatenate([win[k * Bp:k * Bp + rows, :] for k in range(8)],
                          axis=-1).astype(jnp.bfloat16)         # (rows, 8E)
    # one deep-K MXU matmul produces both branch accumulators
    res = jnp.dot(xin, w_ref[...], preferred_element_type=jnp.float32)
    tfa = _ln(res[:, :E] + prm_ref[0:1, :], prm_ref[2:3, :], prm_ref[3:4, :])
    cfa = _ln(res[:, E:] + prm_ref[1:2, :], prm_ref[4:5, :], prm_ref[5:6, :])
    agg = _ln(tfa + cfa, prm_ref[6:7, :], prm_ref[7:8, :])
    o_ref[...] = agg.astype(o_ref.dtype)


# ----------------------------------------------------------------------------
# Kernel B: SelectiveStateSpace — Cb independent chunks per grid step
# ----------------------------------------------------------------------------
def _s6_kernel(u_ref, wbf_ref, bt_ref, vecs_ref, o_ref, h_ref,
               *, T, Bp, Cb, reverse):
    # u_ref  : (Cb, T*Bp, E) f32   Cb independent chunks, (time, batch) rows
    # wbf_ref: (3, E, E)     bf16  [A^T, Wsel^T, C^T]
    # bt_ref : (E, E)        f32   B^T (kept f32: serial recurrence accuracy)
    # vecs_ref: (4, E)       f32   [D, b_sel, gamma, beta]
    # h_ref  : (Cb, T*Bp, E) f32   scratch holding every hidden state
    E = o_ref.shape[-1]
    R = Cb * T * Bp
    u2 = u_ref[...].reshape(R, E)
    ub = u2.astype(jnp.bfloat16)
    d_vec, b_sel = vecs_ref[0:1, :], vecs_ref[1:2, :]
    gamma, beta = vecs_ref[2:3, :], vecs_ref[3:4, :]

    # parallel part of S6: batched over the whole block (big bf16 matmuls)
    xa = jnp.dot(ub, wbf_ref[0], preferred_element_type=jnp.float32)
    sel = jax.nn.sigmoid(
        jnp.dot(ub, wbf_ref[1], preferred_element_type=jnp.float32) + b_sel)
    xa = xa.reshape(Cb, T * Bp, E)
    sel = sel.reshape(Cb, T * Bp, E)

    # serial recurrence: one (Cb*Bp, E) x (E, E) matmul per time step.
    # TODO(synk): on v7x this could stage B^T in the MXU weight registers
    # (matmul_push_rhs once, matmul_acc_lhs per step) to avoid re-pushes.
    Bt = bt_ref[...]
    h = jnp.zeros((Cb * Bp, E), jnp.float32)
    steps = range(T - 1, -1, -1) if reverse else range(T)
    for t in steps:
        lo = t * Bp
        xa_t = xa[:, lo:lo + Bp, :].reshape(Cb * Bp, E)
        s_t = sel[:, lo:lo + Bp, :].reshape(Cb * Bp, E)
        h = jnp.tanh(xa_t + jnp.dot(h, Bt,
                                    preferred_element_type=jnp.float32)) * s_t
        h_ref[:, lo:lo + Bp, :] = h.reshape(Cb, Bp, E)

    hb = h_ref[...].reshape(R, E).astype(jnp.bfloat16)
    y = jnp.dot(hb, wbf_ref[2], preferred_element_type=jnp.float32) + u2 * d_vec
    o_ref[...] = _ln(y, gamma, beta).reshape(Cb, T * Bp, E).astype(o_ref.dtype)


# ----------------------------------------------------------------------------
# Kernel C: bidirectional concat + final LayerNorm(2E)
# ----------------------------------------------------------------------------
def _concat_final_ln_kernel(f_ref, b_ref, prm_ref, o_ref):
    # TODO(synk): for small E the 2E-lane output is still <128 lanes; a
    # production kernel would pack several row tiles side-by-side (or fuse
    # this into the backward-S6 epilogue) to get unmasked lane-dense stores.
    cat = jnp.concatenate([f_ref[...], b_ref[...]], axis=-1)
    o_ref[...] = _ln(cat, prm_ref[0:1, :], prm_ref[1:2, :]).astype(o_ref.dtype)


# ----------------------------------------------------------------------------
# parameter repacking (trace-time glue)
# ----------------------------------------------------------------------------
def _pack_fused_conv_bank(tfa_convs, cfa_convs, E):
    """Fold all six Conv1d's into one (8E, 2E) matmul weight.

    Window offsets are -4..+3 relative to each output position (the module's
    trim keeps trim_left = 0 for every kernel/padding combination used), so
    tap j corresponds to input offset j - 4.  Columns [0:E] hold the tfa
    branch, columns [E:2E] the cfa branch.
    """
    W = jnp.zeros((8 * E, 2 * E), jnp.float32)

    def fold(W, convs, col0):
        biases = []
        ch0 = 0
        for (w, b, pad) in convs:
            cout, _, K = w.shape
            for k in range(K):
                j = k - pad + 4
                W = W.at[j * E:(j + 1) * E,
                         col0 + ch0:col0 + ch0 + cout].set(
                             jnp.transpose(w[:, :, k]))
            biases.append(b)
            ch0 += cout
        return W, jnp.concatenate(biases, axis=0)

    W, bias_t = fold(W, tfa_convs, 0)
    W, bias_c = fold(W, cfa_convs, E)
    return W.astype(jnp.bfloat16), bias_t, bias_c


# ----------------------------------------------------------------------------
# Forward pass (wrapper around the three Pallas kernels)
# ----------------------------------------------------------------------------
def fabis6_forward(x, P, *, history_tokens=16):
    S, B, E = x.shape
    T = int(history_tokens)
    Bp = _round_up(B, 8)          # pad batch to a multiple of 8 sublanes

    # ---- parameter repacking ----
    w_big, bias_tfa, bias_cfa = _pack_fused_conv_bank(P["tfa"], P["cfa"], E)
    prm_a = jnp.stack([bias_tfa, bias_cfa,
                       P["g_tfa"], P["b_tfa"],
                       P["g_cfa"], P["b_cfa"],
                       P["g_feat"], P["b_feat"]], axis=0)          # (8, E)

    def pack_s6(p):
        wbf = jnp.stack([p["A"].T, p["Wsel"].T, p["C"].T],
                        axis=0).astype(jnp.bfloat16)               # (3, E, E)
        bt = p["B"].T.astype(jnp.float32)                          # (E, E)
        vecs = jnp.stack([p["D"], p["bsel"], p["g"], p["b"]], axis=0)
        return wbf, bt, vecs

    s6f = pack_s6(P["s6f"])
    s6b = pack_s6(P["s6b"])
    prm_fin = jnp.stack([P["g_fin"], P["b_fin"]], axis=0)          # (2, 2E)

    # ---- tiling: seq tile is a multiple of lcm(8, T) so conv tiles and S6
    # chunks stay aligned; shrink until there are >=2 grid steps (v7x TCs).
    l = _lcm(8, T)
    target_rows = max(l * Bp, min(8192, (512 * 1024) // (E * 4)))
    ts = max(l, ((target_rows // Bp) // l) * l)
    while ts > l and _round_up(S, ts) // ts < 2:
        ts = max(l, ((ts // 2) // l) * l)
    S_a = _round_up(S, ts)
    NG = S_a // ts

    # ------------------ kernel A: feature aggregation -----------------------
    # XP[j] = x[j - 4] (zeros outside); streamed per seq tile with an
    # 8-position right halo -> kernel-A VMEM is O(ts), not O(S).  No explicit
    # vmem_limit_bytes needed: blocks are sized to fit the default budget.
    S_xp = S_a + ts
    xbp = jnp.pad(x.astype(jnp.float32),
                  ((4, S_xp - S - 4), (0, Bp - B), (0, 0)))
    x_conv_flat = xbp.reshape(S_xp * Bp, E)

    agg_flat = pl.pallas_call(
        functools.partial(_feature_agg_kernel, ts=ts, Bp=Bp),
        out_shape=jax.ShapeDtypeStruct((S_a * Bp, E), jnp.float32),
        grid_spec=pltpu.PrefetchScalarGridSpec(
            num_scalar_prefetch=0,
            grid=(NG,),
            in_specs=[
                pl.BlockSpec((ts * Bp, E), lambda i: (i, 0)),
                pl.BlockSpec((8 * Bp, E), lambda i: ((i + 1) * (ts // 8), 0)),
                _const_spec((8 * E, 2 * E), lambda i: (0, 0)),
                _const_spec((8, E), lambda i: (0, 0)),
            ],
            out_specs=pl.BlockSpec((ts * Bp, E), lambda i: (i, 0)),
        ),
        compiler_params=pltpu.CompilerParams(
            dimension_semantics=("parallel",)),
    )(x_conv_flat, x_conv_flat, w_big, prm_a)

    # ------------------ kernel B: bidirectional selective state space -------
    NC_a = S_a // T                      # chunk count (S_a is a multiple of T)
    if NC_a <= 1:
        Cb = 1
    else:
        cmax = min(16, max(1, NC_a // 2))                # keep >=2 grid steps
        cmax = min(cmax, max(1, (24 * 1024 * 1024) // (28 * T * Bp * E)))
        Cb = _largest_divisor_le(NC_a, cmax)

    def run_s6(u3, params, reverse):
        wbf, bt, vecs = params
        NCp = u3.shape[0]
        return pl.pallas_call(
            functools.partial(_s6_kernel, T=T, Bp=Bp, Cb=Cb, reverse=reverse),
            out_shape=jax.ShapeDtypeStruct((NCp, T * Bp, E), jnp.float32),
            grid_spec=pltpu.PrefetchScalarGridSpec(
                num_scalar_prefetch=0,
                grid=(NCp // Cb,),
                in_specs=[
                    pl.BlockSpec((Cb, T * Bp, E), lambda g: (g, 0, 0)),
                    _const_spec((3, E, E), lambda g: (0, 0, 0)),
                    _const_spec((E, E), lambda g: (0, 0)),
                    _const_spec((4, E), lambda g: (0, 0)),
                ],
                out_specs=pl.BlockSpec((Cb, T * Bp, E), lambda g: (g, 0, 0)),
                scratch_shapes=[pltpu.VMEM((Cb, T * Bp, E), jnp.float32)],
            ),
            compiler_params=pltpu.CompilerParams(
                dimension_semantics=("parallel",)),
        )(u3, wbf, bt, vecs)

    u_fwd = agg_flat.reshape(NC_a, T * Bp, E)
    fwd = run_s6(u_fwd, s6f, reverse=False).reshape(S_a * Bp, E)

    # Backward direction: the seq flip is folded into the kernel by iterating
    # the time loop in reverse within each chunk.  When S % T != 0 the flipped
    # chunking only lines up after front-padding the sequence to a multiple
    # of T; otherwise the forward-padded array can be reused with zero copies.
    P_front = _round_up(S, T) - S
    if P_front == 0:
        u_bwd = u_fwd
    else:
        NC_b = _round_up(_round_up(S, T) // T, Cb)
        u_bwd = jnp.pad(
            agg_flat[:S * Bp],
            ((P_front * Bp, (NC_b * T - P_front - S) * Bp), (0, 0)),
        ).reshape(NC_b, T * Bp, E)
    bwd = run_s6(u_bwd, s6b, reverse=True).reshape(-1, E)
    if P_front == 0:
        bwd_full = bwd
    else:
        bwd_full = jnp.pad(bwd[P_front * Bp:(P_front + S) * Bp],
                           ((0, (S_a - S) * Bp), (0, 0)))

    # ------------------ kernel C: concat + final LayerNorm ------------------
    out_flat = pl.pallas_call(
        _concat_final_ln_kernel,
        out_shape=jax.ShapeDtypeStruct((S_a * Bp, 2 * E), jnp.float32),
        grid_spec=pltpu.PrefetchScalarGridSpec(
            num_scalar_prefetch=0,
            grid=(NG,),
            in_specs=[
                pl.BlockSpec((ts * Bp, E), lambda i: (i, 0)),
                pl.BlockSpec((ts * Bp, E), lambda i: (i, 0)),
                _const_spec((2, 2 * E), lambda i: (0, 0)),
            ],
            out_specs=pl.BlockSpec((ts * Bp, 2 * E), lambda i: (i, 0)),
        ),
        compiler_params=pltpu.CompilerParams(
            dimension_semantics=("parallel",)),
    )(fwd, bwd_full, prm_fin)

    return out_flat[:S * Bp].reshape(S, Bp, 2 * E)[:, :B, :]


# ----------------------------------------------------------------------------
# pure-JAX reference (mirrors the PyTorch module op-for-op)
# ----------------------------------------------------------------------------
def _conv1d_ref(x_bcl, w, b, pad):
    y = jax.lax.conv_general_dilated(
        x_bcl, w, window_strides=(1,), padding=[(pad, pad)],
        dimension_numbers=("NCH", "OIH", "NCH"))
    return y + b[None, :, None]


def _trim_ref(y, L):
    Lout = y.shape[-1]
    if Lout > L:
        excess = Lout - L
        tl = excess // 2
        tr = excess - tl
        return y[..., tl:Lout - tr]
    return y


def _s6_ref(x, p, chunk):
    S, B, E = x.shape
    outs = []
    for i in range(0, S, chunk):
        c = x[i:i + chunk]
        sel = jax.nn.sigmoid(c @ p["Wsel"].T + p["bsel"])
        h = jnp.zeros((B, E), jnp.float32)
        ys = []
        for t in range(c.shape[0]):
            x_t = c[t]
            h = jnp.tanh(x_t @ p["A"].T + h @ p["B"].T) * sel[t]
            ys.append(h @ p["C"].T + x_t * p["D"])
        outs.append(jnp.stack(ys, axis=0))
    y = jnp.concatenate(outs, axis=0)
    return _ln(y, p["g"], p["b"])


def fabis6_reference(x, P, *, history_tokens=16):
    S, B, E = x.shape
    xc = jnp.transpose(x, (1, 2, 0))                      # (B, E, S)

    def branch(convs):
        feats = [_trim_ref(_conv1d_ref(xc, w, b, pad), S)
                 for (w, b, pad) in convs]
        return jnp.transpose(jnp.concatenate(feats, axis=1), (2, 0, 1))

    tfa = _ln(branch(P["tfa"]), P["g_tfa"], P["b_tfa"])
    cfa = _ln(branch(P["cfa"]), P["g_cfa"], P["b_cfa"])
    agg = _ln(tfa + cfa, P["g_feat"], P["b_feat"])
    fwd = _s6_ref(agg, P["s6f"], history_tokens)
    bwd = jnp.flip(_s6_ref(jnp.flip(agg, 0), P["s6b"], history_tokens), 0)
    cat = jnp.concatenate([fwd, bwd], axis=-1)
    return _ln(cat, P["g_fin"], P["b_fin"])


# ----------------------------------------------------------------------------
# parameter construction (mirrors the module's __init__ shapes)
# ----------------------------------------------------------------------------
def init_params(key, E):
    c1 = E // 3
    c3 = E - 2 * c1
    keys = iter(jax.random.split(key, 40))

    def rnd(shape, scale=0.1):
        return scale * jax.random.normal(next(keys), shape, dtype=jnp.float32)

    P = {
        "tfa": [(rnd((c1, E, 2)), rnd((c1,)), 1),
                (rnd((c1, E, 3)), rnd((c1,)), 1),
                (rnd((c3, E, 4)), rnd((c3,)), 2)],
        "cfa": [(rnd((c1, E, 2)), rnd((c1,)), 1),
                (rnd((c1, E, 4)), rnd((c1,)), 2),
                (rnd((c3, E, 8)), rnd((c3,)), 4)],
        "g_tfa": 1.0 + rnd((E,)), "b_tfa": rnd((E,)),
        "g_cfa": 1.0 + rnd((E,)), "b_cfa": rnd((E,)),
        "g_feat": 1.0 + rnd((E,)), "b_feat": rnd((E,)),
        "g_fin": 1.0 + rnd((2 * E,)), "b_fin": rnd((2 * E,)),
    }

    def s6_params():
        return {"A": rnd((E, E)), "B": rnd((E, E)), "C": rnd((E, E)),
                "D": rnd((E,)), "Wsel": rnd((E, E)), "bsel": rnd((E,)),
                "g": 1.0 + rnd((E,)), "b": rnd((E,))}

    P["s6f"] = s6_params()
    P["s6b"] = s6_params()
    return P


if __name__ == "__main__":
    S, B, E = 32, 2, 32            # seq, batch, n_embedding_dim
    HIST = 16                      # history_tokens / S6 chunk size

    key = jax.random.PRNGKey(0)
    kx, kp = jax.random.split(key)
    x = jax.random.normal(kx, (S, B, E), dtype=jnp.float32)
    P = init_params(kp, E)

    out = fabis6_forward(x, P, history_tokens=HIST)
    out = jax.block_until_ready(out)
    assert out.shape == (S, B, 2 * E), out.shape
    assert bool(jnp.all(jnp.isfinite(out)))

    ref = fabis6_reference(x, P, history_tokens=HIST)
    max_err = float(jnp.max(jnp.abs(out - ref)))
    mean_err = float(jnp.mean(jnp.abs(out - ref)))
    # bf16 MXU operands (f32 accumulation) drift slightly vs. the f32 XLA
    # reference; the drift is amplified by the 16-step tanh recurrence and
    # re-normalized by the LayerNorms, so the check is loose in max and tight
    # in mean.
    assert max_err < 2e-1 and mean_err < 5e-2, (max_err, mean_err)
    print("KERNEL_OK")
</pallas_src>

<mosaic_0001>
module attributes {stable_mosaic.version = 11 : i64} {
  func.func @_k(%arg0: i32, %arg1: memref<8x128xf32, #tpu.memory_space<vmem>>, %arg2: memref<8x128xf32, #tpu.memory_space<vmem>>) attributes {dimension_semantics = [#tpu.dimension_semantics<arbitrary>], iteration_bounds = array<i64: 2>, scalar_prefetch = 0 : i64, scratch_operands = 0 : i64, tpu.core_type = #tpu.core_type<tc>, window_params = [{pipeline_mode = #tpu.pipeline_mode<synchronous>, transform_indices = @transform_0, window_bounds = array<i64: 8, 128>}, {pipeline_mode = #tpu.pipeline_mode<synchronous>, transform_indices = @transform_1, window_bounds = array<i64: 8, 128>}]} {
    %c0 = arith.constant 0 : index
    %c0_0 = arith.constant 0 : index
    %0 = vector.load %arg1[%c0, %c0_0] : memref<8x128xf32, #tpu.memory_space<vmem>>, vector<8x128xf32>
    %c0_1 = arith.constant 0 : index
    %c0_2 = arith.constant 0 : index
    %1 = vector.load %arg2[%c0_1, %c0_2] : memref<8x128xf32, #tpu.memory_space<vmem>>, vector<8x128xf32>
    tpu.vector_store %arg2[%c0_1, %c0_2], %0 {strides = array<i32>} : memref<8x128xf32, #tpu.memory_space<vmem>>, vector<8x128xf32>,
    return
  }
  func.func @transform_0(%arg0: i32) -> (i32, i32) {
    %c0_i32 = arith.constant 0 : i32
    %c0_i32_0 = arith.constant 0 : i32
    %c0_i32_1 = arith.constant 0 : i32
    return %c0_i32, %c0_i32_0 : i32, i32
  }
  func.func @transform_1(%arg0: i32) -> (i32, i32) {
    %c0_i32 = arith.constant 0 : i32
    %c0_i32_0 = arith.constant 0 : i32
    %c0_i32_1 = arith.constant 0 : i32
    return %c0_i32, %c0_i32_0 : i32, i32
  }
}

module attributes {stable_mosaic.version = 11 : i64} {
  func.func @_feature_agg_kernel(%arg0: i32, %arg1: memref<128x32xf32, #tpu.memory_space<vmem>>, %arg2: memref<64x32xf32, #tpu.memory_space<vmem>>, %arg3: memref<256x64xbf16, #tpu.memory_space<vmem>>, %arg4: memref<8x32xf32, #tpu.memory_space<vmem>>, %arg5: memref<128x32xf32, #tpu.memory_space<vmem>>) attributes {dimension_semantics = [#tpu.dimension_semantics<parallel>], iteration_bounds = array<i64: 2>, scalar_prefetch = 0 : i64, scratch_operands = 0 : i64, tpu.core_type = #tpu.core_type<tc>, window_params = [{transform_indices = @transform_0, window_bounds = array<i64: 128, 32>}, {transform_indices = @transform_1, window_bounds = array<i64: 64, 32>}, {pipeline_mode = #tpu.pipeline_mode<synchronous>, transform_indices = @transform_2, window_bounds = array<i64: 256, 64>}, {pipeline_mode = #tpu.pipeline_mode<synchronous>, transform_indices = @transform_3, window_bounds = array<i64: 8, 32>}, {transform_indices = @transform_4, window_bounds = array<i64: 128, 32>}]} {
    %c0 = arith.constant 0 : index
    %c0_0 = arith.constant 0 : index
    %0 = vector.load %arg1[%c0, %c0_0] : memref<128x32xf32, #tpu.memory_space<vmem>>, vector<128x32xf32>
    %c0_1 = arith.constant 0 : index
    %c0_2 = arith.constant 0 : index
    %1 = vector.load %arg2[%c0_1, %c0_2] : memref<64x32xf32, #tpu.memory_space<vmem>>, vector<64x32xf32>
    %2 = tpu.concatenate %0, %1 in 0 : vector<128x32xf32>, vector<64x32xf32> -> vector<192x32xf32>
    %3 = vector.extract_strided_slice %2 {offsets = [0, 0], sizes = [128, 32], strides = [1, 1]} : vector<192x32xf32> to vector<128x32xf32>
    %4 = vector.extract_strided_slice %2 {offsets = [8, 0], sizes = [128, 32], strides = [1, 1]} : vector<192x32xf32> to vector<128x32xf32>
    %5 = vector.extract_strided_slice %2 {offsets = [16, 0], sizes = [128, 32], strides = [1, 1]} : vector<192x32xf32> to vector<128x32xf32>
    %6 = vector.extract_strided_slice %2 {offsets = [24, 0], sizes = [128, 32], strides = [1, 1]} : vector<192x32xf32> to vector<128x32xf32>
    %7 = vector.extract_strided_slice %2 {offsets = [32, 0], sizes = [128, 32], strides = [1, 1]} : vector<192x32xf32> to vector<128x32xf32>
    %8 = vector.extract_strided_slice %2 {offsets = [40, 0], sizes = [128, 32], strides = [1, 1]} : vector<192x32xf32> to vector<128x32xf32>
    %9 = vector.extract_strided_slice %2 {offsets = [48, 0], sizes = [128, 32], strides = [1, 1]} : vector<192x32xf32> to vector<128x32xf32>
    %10 = vector.extract_strided_slice %2 {offsets = [56, 0], sizes = [128, 32], strides = [1, 1]} : vector<192x32xf32> to vector<128x32xf32>
    %11 = tpu.concatenate %3, %4, %5, %6, %7, %8, %9, %10 in 1 : vector<128x32xf32>, vector<128x32xf32>, vector<128x32xf32>, vector<128x32xf32>, vector<128x32xf32>, vector<128x32xf32>, vector<128x32xf32>, vector<128x32xf32> -> vector<128x256xf32>
    %12 = arith.truncf %11 : vector<128x256xf32> to vector<128x256xbf16>
    %c0_3 = arith.constant 0 : index
    %c0_4 = arith.constant 0 : index
    %13 = vector.load %arg3[%c0_3, %c0_4] : memref<256x64xbf16, #tpu.memory_space<vmem>>, vector<256x64xbf16>
    %cst = arith.constant dense<0.000000e+00> : vector<128x64xf32>
    %14 = tpu.matmul %12, %13, %cst {dimension_numbers = #tpu.dot_dimension_numbers<[1], [0], [0], [1], [0, 0, 1, 1], [], []>} : vector<128x256xbf16>, vector<256x64xbf16>, vector<128x64xf32> -> vector<128x64xf32>
    %15 = vector.extract_strided_slice %14 {offsets = [0, 0], sizes = [128, 32], strides = [1, 1]} : vector<128x64xf32> to vector<128x32xf32>
    %c0_5 = arith.constant 0 : index
    %c0_6 = arith.constant 0 : index
    %16 = vector.load %arg4[%c0_5, %c0_6] : memref<8x32xf32, #tpu.memory_space<vmem>>, vector<1x32xf32>
    %17 = vector.broadcast %16 : vector<1x32xf32> to vector<128x32xf32>
    %18 = arith.addf %15, %17 : vector<128x32xf32>
    %c2 = arith.constant 2 : index
    %c0_7 = arith.constant 0 : index
    %19 = vector.load %arg4[%c2, %c0_7] : memref<8x32xf32, #tpu.memory_space<vmem>>, vector<1x32xf32>
    %c3 = arith.constant 3 : index
    %c0_8 = arith.constant 0 : index
    %20 = vector.load %arg4[%c3, %c0_8] : memref<8x32xf32, #tpu.memory_space<vmem>>, vector<1x32xf32>
    %cst_9 = arith.constant dense<0.000000e+00> : vector<128xf32>
    %21 = vector.multi_reduction <add>, %18, %cst_9 [1] : vector<128x32xf32> to vector<128xf32>
    %22 = vector.shape_cast %21 : vector<128xf32> to vector<128x1xf32>
    %cst_10 = arith.constant 3.200000e+01 : f32
    %23 = vector.broadcast %cst_10 : f32 to vector<128x1xf32>
    %24 = arith.divf %22, %23 : vector<128x1xf32>
    %25 = vector.broadcast %24 : vector<128x1xf32> to vector<128x32xf32>
    %26 = arith.subf %18, %25 : vector<128x32xf32>
    %27 = arith.mulf %26, %26 : vector<128x32xf32>
    %cst_11 = arith.constant dense<0.000000e+00> : vector<128xf32>
    %28 = vector.multi_reduction <add>, %27, %cst_11 [1] : vector<128x32xf32> to vector<128xf32>
    %29 = vector.shape_cast %28 : vector<128xf32> to vector<128x1xf32>
    %cst_12 = arith.constant 3.200000e+01 : f32
    %30 = vector.broadcast %cst_12 : f32 to vector<128x1xf32>
    %31 = arith.divf %29, %30 : vector<128x1xf32>
    %cst_13 = arith.constant 9.99999974E-6 : f32
    %32 = vector.broadcast %cst_13 : f32 to vector<128x1xf32>
    %33 = arith.addf %31, %32 : vector<128x1xf32>
    %34 = math.rsqrt %33 : vector<128x1xf32>
    %35 = vector.broadcast %34 : vector<128x1xf32> to vector<128x32xf32>
    %36 = arith.mulf %26, %35 : vector<128x32xf32>
    %37 = vector.broadcast %19 : vector<1x32xf32> to vector<128x32xf32>
    %38 = arith.mulf %36, %37 : vector<128x32xf32>
    %39 = vector.broadcast %20 : vector<1x32xf32> to vector<128x32xf32>
    %40 = arith.addf %38, %39 : vector<128x32xf32>
    %41 = vector.extract_strided_slice %14 {offsets = [0, 32], sizes = [128, 32], strides = [1, 1]} : vector<128x64xf32> to vector<128x32xf32>
    %c1 = arith.constant 1 : index
    %c0_14 = arith.constant 0 : index
    %42 = vector.load %arg4[%c1, %c0_14] : memref<8x32xf32, #tpu.memory_space<vmem>>, vector<1x32xf32>
    %43 = vector.broadcast %42 : vector<1x32xf32> to vector<128x32xf32>
    %44 = arith.addf %41, %43 : vector<128x32xf32>
    %c4 = arith.constant 4 : index
    %c0_15 = arith.constant 0 : index
    %45 = vector.load %arg4[%c4, %c0_15] : memref<8x32xf32, #tpu.memory_space<vmem>>, vector<1x32xf32>
    %c5 = arith.constant 5 : index
    %c0_16 = arith.constant 0 : index
    %46 = vector.load %arg4[%c5, %c0_16] : memref<8x32xf32, #tpu.memory_space<vmem>>, vector<1x32xf32>
    %cst_17 = arith.constant dense<0.000000e+00> : vector<128xf32>
    %47 = vector.multi_reduction <add>, %44, %cst_17 [1] : vector<128x32xf32> to vector<128xf32>
    %48 = vector.shape_cast %47 : vector<128xf32> to vector<128x1xf32>
    %cst_18 = arith.constant 3.200000e+01 : f32
    %49 = vector.broadcast %cst_18 : f32 to vector<128x1xf32>
    %50 = arith.divf %48, %49 : vector<128x1xf32>
    %51 = vector.broadcast %50 : vector<128x1xf32> to vector<128x32xf32>
    %52 = arith.subf %44, %51 : vector<128x32xf32>
    %53 = arith.mulf %52, %52 : vector<128x32xf32>
    %cst_19 = arith.constant dense<0.000000e+00> : vector<128xf32>
    %54 = vector.multi_reduction <add>, %53, %cst_19 [1] : vector<128x32xf32> to vector<128xf32>
    %55 = vector.shape_cast %54 : vector<128xf32> to vector<128x1xf32>
    %cst_20 = arith.constant 3.200000e+01 : f32
    %56 = vector.broadcast %cst_20 : f32 to vector<128x1xf32>
    %57 = arith.divf %55, %56 : vector<128x1xf32>
    %cst_21 = arith.constant 9.99999974E-6 : f32
    %58 = vector.broadcast %cst_21 : f32 to vector<128x1xf32>
    %59 = arith.addf %57, %58 : vector<128x1xf32>
    %60 = math.rsqrt %59 : vector<128x1xf32>
    %61 = vector.broadcast %60 : vector<128x1xf32> to vector<128x32xf32>
    %62 = arith.mulf %52, %61 : vector<128x32xf32>
    %63 = vector.broadcast %45 : vector<1x32xf32> to vector<128x32xf32>
    %64 = arith.mulf %62, %63 : vector<128x32xf32>
    %65 = vector.broadcast %46 : vector<1x32xf32> to vector<128x32xf32>
    %66 = arith.addf %64, %65 : vector<128x32xf32>
    %67 = arith.addf %40, %66 : vector<128x32xf32>
    %c6 = arith.constant 6 : index
    %c0_22 = arith.constant 0 : index
    %68 = vector.load %arg4[%c6, %c0_22] : memref<8x32xf32, #tpu.memory_space<vmem>>, vector<1x32xf32>
    %c7 = arith.constant 7 : index
    %c0_23 = arith.constant 0 : index
    %69 = vector.load %arg4[%c7, %c0_23] : memref<8x32xf32, #tpu.memory_space<vmem>>, vector<1x32xf32>
    %cst_24 = arith.constant dense<0.000000e+00> : vector<128xf32>
    %70 = vector.multi_reduction <add>, %67, %cst_24 [1] : vector<128x32xf32> to vector<128xf32>
    %71 = vector.shape_cast %70 : vector<128xf32> to vector<128x1xf32>
    %cst_25 = arith.constant 3.200000e+01 : f32
    %72 = vector.broadcast %cst_25 : f32 to vector<128x1xf32>
    %73 = arith.divf %71, %72 : vector<128x1xf32>
    %74 = vector.broadcast %73 : vector<128x1xf32> to vector<128x32xf32>
    %75 = arith.subf %67, %74 : vector<128x32xf32>
    %76 = arith.mulf %75, %75 : vector<128x32xf32>
    %cst_26 = arith.constant dense<0.000000e+00> : vector<128xf32>
    %77 = vector.multi_reduction <add>, %76, %cst_26 [1] : vector<128x32xf32> to vector<128xf32>
    %78 = vector.shape_cast %77 : vector<128xf32> to vector<128x1xf32>
    %cst_27 = arith.constant 3.200000e+01 : f32
    %79 = vector.broadcast %cst_27 : f32 to vector<128x1xf32>
    %80 = arith.divf %78, %79 : vector<128x1xf32>
    %cst_28 = arith.constant 9.99999974E-6 : f32
    %81 = vector.broadcast %cst_28 : f32 to vector<128x1xf32>
    %82 = arith.addf %80, %81 : vector<128x1xf32>
    %83 = math.rsqrt %82 : vector<128x1xf32>
    %84 = vector.broadcast %83 : vector<128x1xf32> to vector<128x32xf32>
    %85 = arith.mulf %75, %84 : vector<128x32xf32>
    %86 = vector.broadcast %68 : vector<1x32xf32> to vector<128x32xf32>
    %87 = arith.mulf %85, %86 : vector<128x32xf32>
    %88 = vector.broadcast %69 : vector<1x32xf32> to vector<128x32xf32>
    %89 = arith.addf %87, %88 : vector<128x32xf32>
    %c0_29 = arith.constant 0 : index
    %c0_30 = arith.constant 0 : index
    %90 = vector.load %arg5[%c0_29, %c0_30] : memref<128x32xf32, #tpu.memory_space<vmem>>, vector<128x32xf32>
    tpu.vector_store %arg5[%c0_29, %c0_30], %89 {strides = array<i32>} : memref<128x32xf32, #tpu.memory_space<vmem>>, vector<128x32xf32>,
    return
  }
  func.func @transform_0(%arg0: i32) -> (i32, i32) {
    %c0_i32 = arith.constant 0 : i32
    %c0_i32_0 = arith.constant 0 : i32
    return %arg0, %c0_i32 : i32, i32
  }
  func.func @transform_1(%arg0: i32) -> (i32, i32) {
    %c1_i32 = arith.constant 1 : i32
    %0 = arith.addi %arg0, %c1_i32 : i32
    %c2_i32 = arith.constant 2 : i32
    %1 = arith.muli %0, %c2_i32 : i32
    %c0_i32 = arith.constant 0 : i32
    %c0_i32_0 = arith.constant 0 : i32
    return %1, %c0_i32 : i32, i32
  }
  func.func @transform_2(%arg0: i32) -> (i32, i32) {
    %c0_i32 = arith.constant 0 : i32
    %c0_i32_0 = arith.constant 0 : i32
    %c0_i32_1 = arith.constant 0 : i32
    return %c0_i32, %c0_i32_0 : i32, i32
  }
  func.func @transform_3(%arg0: i32) -> (i32, i32) {
    %c0_i32 = arith.constant 0 : i32
    %c0_i32_0 = arith.constant 0 : i32
    %c0_i32_1 = arith.constant 0 : i32
    return %c0_i32, %c0_i32_0 : i32, i32
  }
  func.func @transform_4(%arg0: i32) -> (i32, i32) {
    %c0_i32 = arith.constant 0 : i32
    %c0_i32_0 = arith.constant 0 : i32
    return %arg0, %c0_i32 : i32, i32
  }
}

</mosaic_0001>

<llo_original>
// kernel: tpu_custom_call.1
$region0: #{tpu_custom_call.1}
  #allocation0 [shape = 'u32[]', space=smem, size = 0x4, offset = 0x4, fixed_abs, tag = 'smem constant byte address 0x4 - core index']
  #allocation1 [shape = 'u32[144,128]{1,0:T(1,128)}', space=vmem, size = 0x12000, scoped, tag = 'internal scratch']
  %s0 = inlined_call_operand.hbm [shape: f32[8,128], index: 0, kind: input, shape index: {}]
  %s1 = inlined_call_operand.hbm [shape: f32[8,128], index: 1, kind: output, shape index: {}]
  %s2 = sld [smem:[#allocation0]]
  $region41: #{tpu_custom_call.1} parent=0
    _
  %s4 = ssub.s32 1, %s2
  %s5 = scalar_select 0, %s4, %s2
  $region1: #{tpu_custom_call.1} parent=0
    #allocation2 [shape = 'u8[4096]{0}', space=vmem, size = 0x1000, scoped, tag = 'input window, operand 0, single buffered']
    #allocation3 [shape = 's32[2]{0}', space=sflag, size = 0x8, scoped, tag = 'scoped memory for tpu_custom_call.1']
    #allocation4 [shape = 's32[2]{0}', space=sflag, size = 0x8, scoped, tag = 'scoped memory for tpu_custom_call.1']
    #allocation5 [shape = 'u8[4096]{0}', space=vmem, size = 0x1000, scoped, tag = 'output window, operand 0, single buffered']
    %6 = vsyncpa [#allocation3], 0
    %7 = vsyncpa [#allocation4], 0
    loop: start=0, step=1, limit=4
    $region2: #{tpu_custom_call.1} parent=1 // loop_pre_header
      _
    $region3: #{tpu_custom_call.1} parent=1 // loop_header
      %s9 = sphi 0, %s13
      %p10 = scmp.ge.s32.totalorder %s9, 4
      %s17 = sphi 0, %s17
      %s19 = sphi 0, %s17
      %s20 = sphi 0, %s19
      %s34 = sphi 0, %s20
      %s38 = sphi 0, %s38
      %s40 = sphi 0, %s38
      %s41 = sphi 0, %s40
      %s55 = sphi 0, %s41
    $region4: #{tpu_custom_call.1} parent=1 // loop_header_branch
      %12 = sbr.rel (%p10) target = $region8
    $region5: #{tpu_custom_call.1} parent=1 // loop_body
      %s14 = ssub.s32 %s9, 1
      %s15 = ssub.s32 %s9, 2
      %s16 = sadd.s32 %s9, 1
      %s18 = sadd.s32 %s17, 1
      %p21 = scmp.eq.s32.totalorder %s9, 1
      %p22 = scmp.ne.s32.totalorder %s17, %s19
      %p23 = scmp.eq.s32.totalorder %s9, 0
      %p24 = por %p22, %p23
      %p25 = scmp.ne.s32.totalorder %s17, %s19
      %p26 = scmp.eq.s32.totalorder %s14, 1
      %p27 = por %p25, %p26
      %p28 = scmp.ne.s32.totalorder %s19, %s20
      %p29 = scmp.eq.s32.totalorder %s14, 0
      %p30 = por %p28, %p29
      %p31 = scmp.ne.s32.totalorder %s19, %s20
      %p32 = scmp.eq.s32.totalorder %s15, 1
      %p33 = por %p31, %p32
      %p35 = scmp.ne.s32.totalorder %s20, %s34
      %p36 = scmp.eq.s32.totalorder %s15, 0
      %p37 = por %p35, %p36
      %s39 = sadd.s32 %s38, 1
      %p42 = scmp.eq.s32.totalorder %s9, 1
      %p43 = scmp.ne.s32.totalorder %s38, %s40
      %p44 = scmp.eq.s32.totalorder %s9, 0
      %p45 = por %p43, %p44
      %p46 = scmp.ne.s32.totalorder %s38, %s40
      %p47 = scmp.eq.s32.totalorder %s14, 1
      %p48 = por %p46, %p47
      %p49 = scmp.ne.s32.totalorder %s40, %s41
      %p50 = scmp.eq.s32.totalorder %s14, 0
      %p51 = por %p49, %p50
      %p52 = scmp.ne.s32.totalorder %s40, %s41
      %p53 = scmp.eq.s32.totalorder %s15, 1
      %p54 = por %p52, %p53
      %p56 = scmp.ne.s32.totalorder %s41, %s55
      %p57 = scmp.eq.s32.totalorder %s15, 0
      %p58 = por %p56, %p57
      %p59 = scmp.le.s32.totalorder 1, %s9
      %p60 = scmp.lt.s32.totalorder %s9, 3
      %p61 = pnand %p59, %p60
      %p62 = pneg %p61
      // Predicated region
      $region9: #{tpu_custom_call.1} parent=5 // pred_check
        _
      $region10: #{tpu_custom_call.1} parent=5 // pred_check_branch
        %64 = sbr.rel (%p61) target = $region12
      $region11: #{tpu_custom_call.1} parent=5 // pred_region
        %s65 = ssub.s32 %s9, 1
        // Predicated region
        $region13: #{tpu_custom_call.1} parent=11 // pred_check
          %p66 = pneg %p30
        $region14: #{tpu_custom_call.1} parent=11 // pred_check_branch
          %68 = sbr.rel (%p66) target = $region16
        $region15: #{tpu_custom_call.1} parent=11 // pred_region
          %s70 = ssub.s32 128, 128
          %71 = vsyncadd [#allocation3], %s70
          %s73 = sshll.u32 [#allocation2], 4
          %s74 = int_to_ptr.vmem [resolvable:$true] %s73
          %76 = dma.hbm_to_vmem [thread:$0]  %s0, 128, %s74, [#allocation3]
        $region16: #{tpu_custom_call.1} parent=11 // pred_fallthru
          _
      $region12: #{tpu_custom_call.1} parent=5 // pred_fallthru
        _
      %p77 = scmp.lt.s32.totalorder %s9, 2
      // Predicated region
      $region17: #{tpu_custom_call.1} parent=5 // pred_check
        %p78 = pneg %p77
      $region18: #{tpu_custom_call.1} parent=5 // pred_check_branch
        %80 = sbr.rel (%p78) target = $region20
      $region19: #{tpu_custom_call.1} parent=5 // pred_region
        _
      $region20: #{tpu_custom_call.1} parent=5 // pred_fallthru
        _
      %p81 = scmp.le.s32.totalorder 1, %s9
      %p82 = scmp.lt.s32.totalorder %s9, 3
      %p83 = pnand %p81, %p82
      %p84 = pneg %p83
      // Predicated region
      $region21: #{tpu_custom_call.1} parent=5 // pred_check
        _
      $region22: #{tpu_custom_call.1} parent=5 // pred_check_branch
        %86 = sbr.rel (%p83) target = $region24
      $region23: #{tpu_custom_call.1} parent=5 // pred_region
        %s87 = ssub.s32 %s9, 1
        // Predicated region
        $region25: #{tpu_custom_call.1} parent=23 // pred_check
          %p88 = pneg %p30
        $region26: #{tpu_custom_call.1} parent=23 // pred_check_branch
          %90 = sbr.rel (%p88) target = $region28
        $region27: #{tpu_custom_call.1} parent=23 // pred_region
          %91 = dma.done [#allocation3], 128
        $region28: #{tpu_custom_call.1} parent=23 // pred_fallthru
          _
        %p92 = pneg %p30
        %p93 = pneg %p27
        %p94 = pneg %p51
        %p95 = pneg %p48
        %v96 = vld [vmem:[#allocation2] sm:$0xff]
        %97 = vst [vmem:[#allocation5] sm:$0xff] %v96
        // Predicated region
        $region29: #{tpu_custom_call.1} parent=23 // pred_check
          %p98 = pneg %p48
        $region30: #{tpu_custom_call.1} parent=23 // pred_check_branch
          %100 = sbr.rel (%p98) target = $region32
        $region31: #{tpu_custom_call.1} parent=23 // pred_region
          %s102 = ssub.s32 128, 128
          %103 = vsyncadd [#allocation4], %s102
          %s105 = sshll.u32 [#allocation5], 4
          %s106 = int_to_ptr.vmem [resolvable:$true] %s105
          %108 = dma.vmem_to_hbm [thread:$0]  %s106, 128, %s1, [#allocation4]
        $region32: #{tpu_custom_call.1} parent=23 // pred_fallthru
          _
        // Predicated region
        $region33: #{tpu_custom_call.1} parent=23 // pred_check
          %p109 = pneg %p48
        $region34: #{tpu_custom_call.1} parent=23 // pred_check_branch
          %111 = sbr.rel (%p109) target = $region36
        $region35: #{tpu_custom_call.1} parent=23 // pred_region
          %112 = dma.done [#allocation4], 128
        $region36: #{tpu_custom_call.1} parent=23 // pred_fallthru
          _
      $region24: #{tpu_custom_call.1} parent=5 // pred_fallthru
        _
      %p113 = scmp.le.s32.totalorder 2, %s9
      // Predicated region
      $region37: #{tpu_custom_call.1} parent=5 // pred_check
        %p114 = pneg %p113
      $region38: #{tpu_custom_call.1} parent=5 // pred_check_branch
        %116 = sbr.rel (%p114) target = $region40
      $region39: #{tpu_custom_call.1} parent=5 // pred_region
        %s117 = ssub.s32 %s9, 2
      $region40: #{tpu_custom_call.1} parent=5 // pred_fallthru
        _
    $region6: #{tpu_custom_call.1} parent=1 // loop_footer
      %s13 = sadd.s32 1, %s9
    $region7: #{tpu_custom_call.1} parent=1 // loop_footer_branch
      %8 = sbr.rel target = $region3
    $region8: #{tpu_custom_call.1} parent=1 // loop_exit
      _
    %118 = vsyncpa [#allocation3], 1
    %s119 = scalar_lea.sflag [#allocation3], 1
    %120 = vsyncpa %s119, 1
    %121 = vsyncpa [#allocation4], 1
    %s122 = scalar_lea.sflag [#allocation4], 1
    %123 = vsyncpa %s122, 1

// kernel: tpu_custom_call.1
$region0: #{tpu_custom_call.1}
  #allocation0 [shape = 'u32[]', space=smem, size = 0x4, offset = 0x4, fixed_abs, tag = 'smem constant byte address 0x4 - core index']
  #allocation1 [shape = 'u32[144,128]{1,0:T(1,128)}', space=vmem, size = 0x12000, scoped, tag = 'internal scratch']
  %s0 = inlined_call_operand.vmem [shape: f32[384,32], index: 0, kind: input, shape index: {}]
  %s1 = inlined_call_operand.vmem [shape: f32[384,32], index: 1, kind: input, shape index: {}]
  %s2 = inlined_call_operand.vmem [shape: bf16[256,64], index: 2, kind: input, shape index: {}]
  %s3 = inlined_call_operand.vmem [shape: f32[8,32], index: 3, kind: input, shape index: {}]
  %s4 = inlined_call_operand.vmem [shape: f32[256,32], index: 4, kind: output, shape index: {}]
  %s5 = sld [smem:[#allocation0]]
  $region49: #{tpu_custom_call.1} parent=0
    _
  %s7 = ssub.s32 1, %s5
  %s8 = scalar_select 0, %s7, %s5
  loop: start=0, step=1, limit=4
  $region2: #{tpu_custom_call.1} parent=0 // loop_pre_header
    _
  $region3: #{tpu_custom_call.1} parent=0 // loop_header
    %s10 = sphi 0, %s14
    %p11 = scmp.ge.s32.totalorder %s10, 4
    %s20 = sphi 0, %s22
    %s23 = sphi 0, %s20
    %s24 = sphi 0, %s23
    %s40 = sphi 0, %s24
    %s50 = sphi 0, %s52
    %s53 = sphi 0, %s50
    %s54 = sphi 0, %s53
    %s70 = sphi 0, %s54
    %s74 = sphi 0, %s74
    %s76 = sphi 0, %s74
    %s77 = sphi 0, %s76
    %s91 = sphi 0, %s77
    %s95 = sphi 0, %s95
    %s97 = sphi 0, %s95
    %s98 = sphi 0, %s97
    %s112 = sphi 0, %s98
    %s118 = sphi 0, %s120
    %s121 = sphi 0, %s118
    %s122 = sphi 0, %s121
    %s138 = sphi 0, %s122
  $region4: #{tpu_custom_call.1} parent=0 // loop_header_branch
    %13 = sbr.rel (%p11) target = $region8
  $region5: #{tpu_custom_call.1} parent=0 // loop_body
    %s15 = ssub.s32 %s10, 1
    %s16 = ssub.s32 %s10, 2
    %s17 = sadd.s32 %s10, 1
    %s18 = ssub.s32 %s10, %s17
    %p19 = scmp.eq.s32.totalorder %s18, 0
    %s21 = sadd.s32 %s20, 1
    %s22 = scalar_select %p19, %s20, %s21
    %p25 = pneg %p19
    %p26 = scmp.eq.s32.totalorder %s10, 1
    %p27 = por %p25, %p26
    %p28 = scmp.ne.s32.totalorder %s20, %s23
    %p29 = scmp.eq.s32.totalorder %s10, 0
    %p30 = por %p28, %p29
    %p31 = scmp.ne.s32.totalorder %s20, %s23
    %p32 = scmp.eq.s32.totalorder %s15, 1
    %p33 = por %p31, %p32
    %p34 = scmp.ne.s32.totalorder %s23, %s24
    %p35 = scmp.eq.s32.totalorder %s15, 0
    %p36 = por %p34, %p35
    %p37 = scmp.ne.s32.totalorder %s23, %s24
    %p38 = scmp.eq.s32.totalorder %s16, 1
    %p39 = por %p37, %p38
    %p41 = scmp.ne.s32.totalorder %s24, %s40
    %p42 = scmp.eq.s32.totalorder %s16, 0
    %p43 = por %p41, %p42
    %s44 = sadd.s32 %s10, 1
    %s45 = smul.u32 %s44, 2
    %s46 = sadd.s32 %s17, 1
    %s47 = smul.u32 %s46, 2
    %s48 = ssub.s32 %s45, %s47
    %p49 = scmp.eq.s32.totalorder %s48, 0
    %s51 = sadd.s32 %s50, 1
    %s52 = scalar_select %p49, %s50, %s51
    %p55 = pneg %p49
    %p56 = scmp.eq.s32.totalorder %s10, 1
    %p57 = por %p55, %p56
    %p58 = scmp.ne.s32.totalorder %s50, %s53
    %p59 = scmp.eq.s32.totalorder %s10, 0
    %p60 = por %p58, %p59
    %p61 = scmp.ne.s32.totalorder %s50, %s53
    %p62 = scmp.eq.s32.totalorder %s15, 1
    %p63 = por %p61, %p62
    %p64 = scmp.ne.s32.totalorder %s53, %s54
    %p65 = scmp.eq.s32.totalorder %s15, 0
    %p66 = por %p64, %p65
    %p67 = scmp.ne.s32.totalorder %s53, %s54
    %p68 = scmp.eq.s32.totalorder %s16, 1
    %p69 = por %p67, %p68
    %p71 = scmp.ne.s32.totalorder %s54, %s70
    %p72 = scmp.eq.s32.totalorder %s16, 0
    %p73 = por %p71, %p72
    %s75 = sadd.s32 %s74, 1
    %p78 = scmp.eq.s32.totalorder %s10, 1
    %p79 = scmp.ne.s32.totalorder %s74, %s76
    %p80 = scmp.eq.s32.totalorder %s10, 0
    %p81 = por %p79, %p80
    %p82 = scmp.ne.s32.totalorder %s74, %s76
    %p83 = scmp.eq.s32.totalorder %s15, 1
    %p84 = por %p82, %p83
    %p85 = scmp.ne.s32.totalorder %s76, %s77
    %p86 = scmp.eq.s32.totalorder %s15, 0
    %p87 = por %p85, %p86
    %p88 = scmp.ne.s32.totalorder %s76, %s77
    %p89 = scmp.eq.s32.totalorder %s16, 1
    %p90 = por %p88, %p89
    %p92 = scmp.ne.s32.totalorder %s77, %s91
    %p93 = scmp.eq.s32.totalorder %s16, 0
    %p94 = por %p92, %p93
    %s96 = sadd.s32 %s95, 1
    %p99 = scmp.eq.s32.totalorder %s10, 1
    %p100 = scmp.ne.s32.totalorder %s95, %s97
    %p101 = scmp.eq.s32.totalorder %s10, 0
    %p102 = por %p100, %p101
    %p103 = scmp.ne.s32.totalorder %s95, %s97
    %p104 = scmp.eq.s32.totalorder %s15, 1
    %p105 = por %p103, %p104
    %p106 = scmp.ne.s32.totalorder %s97, %s98
    %p107 = scmp.eq.s32.totalorder %s15, 0
    %p108 = por %p106, %p107
    %p109 = scmp.ne.s32.totalorder %s97, %s98
    %p110 = scmp.eq.s32.totalorder %s16, 1
    %p111 = por %p109, %p110
    %p113 = scmp.ne.s32.totalorder %s98, %s112
    %p114 = scmp.eq.s32.totalorder %s16, 0
    %p115 = por %p113, %p114
    %s116 = ssub.s32 %s10, %s17
    %p117 = scmp.eq.s32.totalorder %s116, 0
    %s119 = sadd.s32 %s118, 1
    %s120 = scalar_select %p117, %s118, %s119
    %p123 = pneg %p117
    %p124 = scmp.eq.s32.totalorder %s10, 1
    %p125 = por %p123, %p124
    %p126 = scmp.ne.s32.totalorder %s118, %s121
    %p127 = scmp.eq.s32.totalorder %s10, 0
    %p128 = por %p126, %p127
    %p129 = scmp.ne.s32.totalorder %s118, %s121
    %p130 = scmp.eq.s32.totalorder %s15, 1
    %p131 = por %p129, %p130
    %p132 = scmp.ne.s32.totalorder %s121, %s122
    %p133 = scmp.eq.s32.totalorder %s15, 0
    %p134 = por %p132, %p133
    %p135 = scmp.ne.s32.totalorder %s121, %s122
    %p136 = scmp.eq.s32.totalorder %s16, 1
    %p137 = por %p135, %p136
    %p139 = scmp.ne.s32.totalorder %s122, %s138
    %p140 = scmp.eq.s32.totalorder %s16, 0
    %p141 = por %p139, %p140
    %p142 = scmp.le.s32.totalorder 1, %s10
    %p143 = scmp.lt.s32.totalorder %s10, 3
    %p144 = pnand %p142, %p143
    %p145 = pneg %p144
    // Predicated region
    $region9: #{tpu_custom_call.1} parent=5 // pred_check
      _
    $region10: #{tpu_custom_call.1} parent=5 // pred_check_branch
      %147 = sbr.rel (%p144) target = $region12
    $region11: #{tpu_custom_call.1} parent=5 // pred_region
      %s148 = ssub.s32 %s10, 1
      // Predicated region
      $region13: #{tpu_custom_call.1} parent=11 // pred_check
        %p149 = pneg %p87
      $region14: #{tpu_custom_call.1} parent=11 // pred_check_branch
        %151 = sbr.rel (%p149) target = $region16
      $region15: #{tpu_custom_call.1} parent=11 // pred_region
        _
      $region16: #{tpu_custom_call.1} parent=11 // pred_fallthru
        _
      // Predicated region
      $region17: #{tpu_custom_call.1} parent=11 // pred_check
        %p152 = pneg %p108
      $region18: #{tpu_custom_call.1} parent=11 // pred_check_branch
        %154 = sbr.rel (%p152) target = $region20
      $region19: #{tpu_custom_call.1} parent=11 // pred_region
        _
      $region20: #{tpu_custom_call.1} parent=11 // pred_fallthru
        _
    $region12: #{tpu_custom_call.1} parent=5 // pred_fallthru
      _
    %p155 = scmp.lt.s32.totalorder %s10, 2
    // Predicated region
    $region21: #{tpu_custom_call.1} parent=5 // pred_check
      %p156 = pneg %p155
    $region22: #{tpu_custom_call.1} parent=5 // pred_check_branch
      %158 = sbr.rel (%p156) target = $region24
    $region23: #{tpu_custom_call.1} parent=5 // pred_region
      // Predicated region
      $region25: #{tpu_custom_call.1} parent=23 // pred_check
        %p159 = pneg %p30
      $region26: #{tpu_custom_call.1} parent=23 // pred_check_branch
        %161 = sbr.rel (%p159) target = $region28
      $region27: #{tpu_custom_call.1} parent=23 // pred_region
        %s162 = smul.u32 16, %s10
        %p163 = scmp.lt.s32.totalorder %s162, 47
        %s164 = scalar_select %p163, %s162, 47
        %s165 = smul.addr %s164, 8
        %s166 = scalar_lea.vmem %s0, %s165
        %s167 = smul.u32 16, %s10
      $region28: #{tpu_custom_call.1} parent=23 // pred_fallthru
        _
      // Predicated region
      $region29: #{tpu_custom_call.1} parent=23 // pred_check
        %p168 = pneg %p60
      $region30: #{tpu_custom_call.1} parent=23 // pred_check_branch
        %170 = sbr.rel (%p168) target = $region32
      $region31: #{tpu_custom_call.1} parent=23 // pred_region
        %s171 = sadd.s32 %s10, 1
        %s172 = smul.u32 %s171, 2
        %s173 = smul.u32 8, %s172
        %p174 = scmp.lt.s32.totalorder %s173, 47
        %s175 = scalar_select %p174, %s173, 47
        %s176 = smul.addr %s175, 8
        %s177 = scalar_lea.vmem %s1, %s176
        %s178 = sadd.s32 %s10, 1
        %s179 = smul.u32 %s178, 2
        %s180 = smul.u32 8, %s179
      $region32: #{tpu_custom_call.1} parent=23 // pred_fallthru
        _
    $region24: #{tpu_custom_call.1} parent=5 // pred_fallthru
      _
    %p181 = scmp.le.s32.totalorder 1, %s10
    %p182 = scmp.lt.s32.totalorder %s10, 3
    %p183 = pnand %p181, %p182
    %p184 = pneg %p183
    // Predicated region
    $region33: #{tpu_custom_call.1} parent=5 // pred_check
      _
    $region34: #{tpu_custom_call.1} parent=5 // pred_check_branch
      %186 = sbr.rel (%p183) target = $region36
    $region35: #{tpu_custom_call.1} parent=5 // pred_region
      %s187 = ssub.s32 %s10, 1
      %s188 = smul.u32 16, %s15
      %p189 = scmp.lt.s32.totalorder %s188, 47
      %s190 = scalar_select %p189, %s188, 47
      %s191 = smul.addr %s190, 8
      %s192 = scalar_lea.vmem %s0, %s191
      %p193 = pneg %p36
      %p194 = pneg %p33
      %s195 = sadd.s32 %s15, 1
      %s196 = smul.u32 %s195, 2
      %s197 = smul.u32 8, %s196
      %p198 = scmp.lt.s32.totalorder %s197, 47
      %s199 = scalar_select %p198, %s197, 47
      %s200 = smul.addr %s199, 8
      %s201 = scalar_lea.vmem %s1, %s200
      %p202 = pneg %p66
      %p203 = pneg %p63
      %p204 = pneg %p87
      %p205 = pneg %p84
      %p206 = pneg %p108
      %p207 = pneg %p105
      %p208 = pneg %p134
      %p209 = pneg %p131
      %s210 = smul.u32 16, %s15
      %p211 = scmp.lt.s32.totalorder %s210, 31
      %s212 = scalar_select %p211, %s210, 31
      %s213 = smul.addr %s212, 8
      %s214 = scalar_lea.vmem %s4, %s213
      %s215 = smul.u32 16, %s15
      %p216 = scmp.lt.s32.totalorder %s215, 47
      %s217 = scalar_select %p216, %s215, 47
      %s218 = smul.addr %s217, 8
      %s219 = scalar_lea.vmem %s0, %s218
      %s220 = smul.u32 16, %s15
      %s221 = sadd.s32 %s15, 1
      %s222 = smul.u32 %s221, 2
      %s223 = smul.u32 8, %s222
      %p224 = scmp.lt.s32.totalorder %s223, 47
      %s225 = scalar_select %p224, %s223, 47
      %s226 = smul.addr %s225, 8
      %s227 = scalar_lea.vmem %s1, %s226
      %s228 = sadd.s32 %s15, 1
      %s229 = smul.u32 %s228, 2
      %s230 = smul.u32 8, %s229
      %s231 = smul.u32 16, %s15
      %p232 = scmp.lt.s32.totalorder %s231, 31
      %s233 = scalar_select %p232, %s231, 31
      %s234 = smul.addr %s233, 8
      %s235 = scalar_lea.vmem %s4, %s234
      %s236 = smul.u32 16, %s15
      %v238 = vld [vmem:[%s219] sm:$0xff]
      %v239 = vld [vmem:[%s219 + $0x8] sm:$0xff]
      %v240 = vld [vmem:[%s219 + $0x10] sm:$0xff]
      %v241 = vld [vmem:[%s219 + $0x18] sm:$0xff]
      %v242 = vld [vmem:[%s219 + $0x20] sm:$0xff]
      %v243 = vld [vmem:[%s219 + $0x28] sm:$0xff]
      %v244 = vld [vmem:[%s219 + $0x30] sm:$0xff]
      %v245 = vld [vmem:[%s219 + $0x38] sm:$0xff]
      %v246 = vld [vmem:[%s219 + $0x40] sm:$0xff]
      %v247 = vld [vmem:[%s219 + $0x48] sm:$0xff]
      %v248 = vld [vmem:[%s219 + $0x50] sm:$0xff]
      %v249 = vld [vmem:[%s219 + $0x58] sm:$0xff]
      %v250 = vld [vmem:[%s219 + $0x60] sm:$0xff]
      %v251 = vld [vmem:[%s219 + $0x68] sm:$0xff]
      %v252 = vld [vmem:[%s219 + $0x70] sm:$0xff]
      %v253 = vld [vmem:[%s219 + $0x78] sm:$0xff]
      %v254 = vld [vmem:[%s227] sm:$0xff]
      %v255 = vld [vmem:[%s227 + $0x8] sm:$0xff]
      %v256 = vld [vmem:[%s227 + $0x10] sm:$0xff]
      %v257 = vld [vmem:[%s227 + $0x18] sm:$0xff]
      %v258 = vld [vmem:[%s227 + $0x20] sm:$0xff]
      %v259 = vld [vmem:[%s227 + $0x28] sm:$0xff]
      %v260 = vld [vmem:[%s227 + $0x30] sm:$0xff]
      %277 = vrot.lane.b32.xlu0 %v239, 32
      %v278 = vpop.permute.xlu0 %277
      %279 = vrot.lane.b32.xlu0 %v240, 32
      %v280 = vpop.permute.xlu0 %279
      %281 = vrot.lane.b32.xlu0 %v241, 32
      %v282 = vpop.permute.xlu0 %281
      %283 = vrot.lane.b32.xlu0 %v242, 32
      %v284 = vpop.permute.xlu0 %283
      %285 = vrot.lane.b32.xlu0 %v243, 32
      %v286 = vpop.permute.xlu0 %285
      %287 = vrot.lane.b32.xlu0 %v244, 32
      %v288 = vpop.permute.xlu0 %287
      %289 = vrot.lane.b32.xlu0 %v245, 32
      %v290 = vpop.permute.xlu0 %289
      %291 = vrot.lane.b32.xlu0 %v246, 32
      %v292 = vpop.permute.xlu0 %291
      %293 = vrot.lane.b32.xlu0 %v247, 32
      %v294 = vpop.permute.xlu0 %293
      %295 = vrot.lane.b32.xlu0 %v248, 32
      %v296 = vpop.permute.xlu0 %295
      %297 = vrot.lane.b32.xlu0 %v249, 32
      %v298 = vpop.permute.xlu0 %297
      %299 = vrot.lane.b32.xlu0 %v250, 32
      %v300 = vpop.permute.xlu0 %299
      %301 = vrot.lane.b32.xlu0 %v251, 32
      %v302 = vpop.permute.xlu0 %301
      %303 = vrot.lane.b32.xlu0 %v252, 32
      %v304 = vpop.permute.xlu0 %303
      %305 = vrot.lane.b32.xlu0 %v253, 32
      %v306 = vpop.permute.xlu0 %305
      %307 = vrot.lane.b32.xlu0 %v254, 32
      %v308 = vpop.permute.xlu0 %307
      %326 = vrot.lane.b32.xlu0 %v240, 64
      %v327 = vpop.permute.xlu0 %326
      %328 = vrot.lane.b32.xlu0 %v241, 64
      %v329 = vpop.permute.xlu0 %328
      %330 = vrot.lane.b32.xlu0 %v242, 64
      %v331 = vpop.permute.xlu0 %330
      %332 = vrot.lane.b32.xlu0 %v243, 64
      %v333 = vpop.permute.xlu0 %332
      %334 = vrot.lane.b32.xlu0 %v244, 64
      %v335 = vpop.permute.xlu0 %334
      %336 = vrot.lane.b32.xlu0 %v245, 64
      %v337 = vpop.permute.xlu0 %336
      %338 = vrot.lane.b32.xlu0 %v246, 64
      %v339 = vpop.permute.xlu0 %338
      %340 = vrot.lane.b32.xlu0 %v247, 64
      %v341 = vpop.permute.xlu0 %340
      %342 = vrot.lane.b32.xlu0 %v248, 64
      %v343 = vpop.permute.xlu0 %342
      %344 = vrot.lane.b32.xlu0 %v249, 64
      %v345 = vpop.permute.xlu0 %344
      %346 = vrot.lane.b32.xlu0 %v250, 64
      %v347 = vpop.permute.xlu0 %346
      %348 = vrot.lane.b32.xlu0 %v251, 64
      %v349 = vpop.permute.xlu0 %348
      %350 = vrot.lane.b32.xlu0 %v252, 64
      %v351 = vpop.permute.xlu0 %350
      %352 = vrot.lane.b32.xlu0 %v253, 64
      %v353 = vpop.permute.xlu0 %352
      %354 = vrot.lane.b32.xlu0 %v254, 64
      %v355 = vpop.permute.xlu0 %354
      %356 = vrot.lane.b32.xlu0 %v255, 64
      %v357 = vpop.permute.xlu0 %356
      %375 = vrot.lane.b32.xlu0 %v241, 96
      %v376 = vpop.permute.xlu0 %375
      %377 = vrot.lane.b32.xlu0 %v242, 96
      %v378 = vpop.permute.xlu0 %377
      %379 = vrot.lane.b32.xlu0 %v243, 96
      %v380 = vpop.permute.xlu0 %379
      %381 = vrot.lane.b32.xlu0 %v244, 96
      %v382 = vpop.permute.xlu0 %381
      %383 = vrot.lane.b32.xlu0 %v245, 96
      %v384 = vpop.permute.xlu0 %383
      %385 = vrot.lane.b32.xlu0 %v246, 96
      %v386 = vpop.permute.xlu0 %385
      %387 = vrot.lane.b32.xlu0 %v247, 96
      %v388 = vpop.permute.xlu0 %387
      %389 = vrot.lane.b32.xlu0 %v248, 96
      %v390 = vpop.permute.xlu0 %389
      %391 = vrot.lane.b32.xlu0 %v249, 96
      %v392 = vpop.permute.xlu0 %391
      %393 = vrot.lane.b32.xlu0 %v250, 96
      %v394 = vpop.permute.xlu0 %393
      %395 = vrot.lane.b32.xlu0 %v251, 96
      %v396 = vpop.permute.xlu0 %395
      %397 = vrot.lane.b32.xlu0 %v252, 96
      %v398 = vpop.permute.xlu0 %397
      %399 = vrot.lane.b32.xlu0 %v253, 96
      %v400 = vpop.permute.xlu0 %399
      %401 = vrot.lane.b32.xlu0 %v254, 96
      %v402 = vpop.permute.xlu0 %401
      %403 = vrot.lane.b32.xlu0 %v255, 96
      %v404 = vpop.permute.xlu0 %403
      %405 = vrot.lane.b32.xlu0 %v256, 96
      %v406 = vpop.permute.xlu0 %405
      %425 = vrot.lane.b32.xlu0 %v255, 32
      %v426 = vpop.permute.xlu0 %425
      %427 = vrot.lane.b32.xlu0 %v256, 32
      %v428 = vpop.permute.xlu0 %427
      %429 = vrot.lane.b32.xlu0 %v257, 32
      %v430 = vpop.permute.xlu0 %429
      %431 = vrot.lane.b32.xlu0 %v258, 32
      %v432 = vpop.permute.xlu0 %431
      %438 = vrot.lane.b32.xlu0 %v256, 64
      %v439 = vpop.permute.xlu0 %438
      %440 = vrot.lane.b32.xlu0 %v257, 64
      %v441 = vpop.permute.xlu0 %440
      %442 = vrot.lane.b32.xlu0 %v258, 64
      %v443 = vpop.permute.xlu0 %442
      %444 = vrot.lane.b32.xlu0 %v259, 64
      %v445 = vpop.permute.xlu0 %444
      %451 = vrot.lane.b32.xlu0 %v257, 96
      %v452 = vpop.permute.xlu0 %451
      %453 = vrot.lane.b32.xlu0 %v258, 96
      %v454 = vpop.permute.xlu0 %453
      %455 = vrot.lane.b32.xlu0 %v259, 96
      %v456 = vpop.permute.xlu0 %455
      %457 = vrot.lane.b32.xlu0 %v260, 96
      %v458 = vpop.permute.xlu0 %457
      %vm463 = vcmask 261120
      %v464 = vsel %vm463, %v238, %v278
      %v465 = vsel %vm463, %v239, %v280
      %v466 = vsel %vm463, %v240, %v282
      %v467 = vsel %vm463, %v241, %v284
      %v468 = vsel %vm463, %v242, %v286
      %v469 = vsel %vm463, %v243, %v288
      %v470 = vsel %vm463, %v244, %v290
      %v471 = vsel %vm463, %v245, %v292
      %v472 = vsel %vm463, %v246, %v294
      %v473 = vsel %vm463, %v247, %v296
      %v474 = vsel %vm463, %v248, %v298
      %v475 = vsel %vm463, %v249, %v300
      %v476 = vsel %vm463, %v250, %v302
      %v477 = vsel %vm463, %v251, %v304
      %v478 = vsel %vm463, %v252, %v306
      %v479 = vsel %vm463, %v253, %v308
      %vm480 = vcmask 523264
      %v481 = vsel %vm480, %v464, %v327
      %v482 = vsel %vm480, %v465, %v329
      %v483 = vsel %vm480, %v466, %v331
      %v484 = vsel %vm480, %v467, %v333
      %v485 = vsel %vm480, %v468, %v335
      %v486 = vsel %vm480, %v469, %v337
      %v487 = vsel %vm480, %v470, %v339
      %v488 = vsel %vm480, %v471, %v341
      %v489 = vsel %vm480, %v472, %v343
      %v490 = vsel %vm480, %v473, %v345
      %v491 = vsel %vm480, %v474, %v347
      %v492 = vsel %vm480, %v475, %v349
      %v493 = vsel %vm480, %v476, %v351
      %v494 = vsel %vm480, %v477, %v353
      %v495 = vsel %vm480, %v478, %v355
      %v496 = vsel %vm480, %v479, %v357
      %vm497 = vcmask 785408
      %v498 = vsel %vm497, %v481, %v376
      %v499 = vsel %vm497, %v482, %v378
      %v500 = vsel %vm497, %v483, %v380
      %v501 = vsel %vm497, %v484, %v382
      %v502 = vsel %vm497, %v485, %v384
      %v503 = vsel %vm497, %v486, %v386
      %v504 = vsel %vm497, %v487, %v388
      %v505 = vsel %vm497, %v488, %v390
      %v506 = vsel %vm497, %v489, %v392
      %v507 = vsel %vm497, %v490, %v394
      %v508 = vsel %vm497, %v491, %v396
      %v509 = vsel %vm497, %v492, %v398
      %v510 = vsel %vm497, %v493, %v400
      %v511 = vsel %vm497, %v494, %v402
      %v512 = vsel %vm497, %v495, %v404
      %v513 = vsel %vm497, %v496, %v406
      %v514 = vsel %vm463, %v254, %v426
      %v515 = vsel %vm463, %v255, %v428
      %v516 = vsel %vm463, %v256, %v430
      %v517 = vsel %vm463, %v257, %v432
      %v518 = vsel %vm480, %v514, %v439
      %v519 = vsel %vm480, %v515, %v441
      %v520 = vsel %vm480, %v516, %v443
      %v521 = vsel %vm480, %v517, %v445
      %v522 = vsel %vm497, %v518, %v452
      %v523 = vsel %vm497, %v519, %v454
      %v524 = vsel %vm497, %v520, %v456
      %v525 = vsel %vm497, %v521, %v458
      %v526 = vpack.c.bf16 %v499, %v498
      %v527 = vpack.c.bf16 %v503, %v502
      %v528 = vpack.c.bf16 %v501, %v500
      %v529 = vpack.c.bf16 %v505, %v504
      %v530 = vpack.c.bf16 %v507, %v506
      %v531 = vpack.c.bf16 %v509, %v508
      %v532 = vpack.c.bf16 %v511, %v510
      %v533 = vpack.c.bf16 %v513, %v512
      %v534 = vpack.c.bf16 %v523, %v522
      %v535 = vpack.c.bf16 %v525, %v524
      %v536 = vld [vmem:[%s2] sm:$0xf]
      %v537 = vld [vmem:[%s2 + $0x4] sm:$0xf]
      %v538 = vld [vmem:[%s2 + $0x8] sm:$0xf]
      %v539 = vld [vmem:[%s2 + $0xc] sm:$0xf]
      %v540 = vld [vmem:[%s2 + $0x10] sm:$0xf]
      %v541 = vld [vmem:[%s2 + $0x14] sm:$0xf]
      %v542 = vld [vmem:[%s2 + $0x18] sm:$0xf]
      %v543 = vld [vmem:[%s2 + $0x1c] sm:$0xf]
      %v544 = vld [vmem:[%s2 + $0x20] sm:$0xf]
      %v545 = vld [vmem:[%s2 + $0x24] sm:$0xf]
      %v546 = vld [vmem:[%s2 + $0x28] sm:$0xf]
      %v547 = vld [vmem:[%s2 + $0x2c] sm:$0xf]
      %v548 = vld [vmem:[%s2 + $0x30] sm:$0xf]
      %v549 = vld [vmem:[%s2 + $0x34] sm:$0xf]
      %v550 = vld [vmem:[%s2 + $0x38] sm:$0xf]
      %v551 = vld [vmem:[%s2 + $0x3c] sm:$0xf]
      %v552 = vld [vmem:[%s2 + $0x40] sm:$0xf]
      %v553 = vld [vmem:[%s2 + $0x44] sm:$0xf]
      %v554 = vld [vmem:[%s2 + $0x48] sm:$0xf]
      %v555 = vld [vmem:[%s2 + $0x4c] sm:$0xf]
      %v556 = vld [vmem:[%s2 + $0x50] sm:$0xf]
      %v557 = vld [vmem:[%s2 + $0x54] sm:$0xf]
      %v558 = vld [vmem:[%s2 + $0x58] sm:$0xf]
      %v559 = vld [vmem:[%s2 + $0x5c] sm:$0xf]
      %v560 = vld [vmem:[%s2 + $0x60] sm:$0xf]
      %v561 = vld [vmem:[%s2 + $0x64] sm:$0xf]
      %v562 = vld [vmem:[%s2 + $0x68] sm:$0xf]
      %v563 = vld [vmem:[%s2 + $0x6c] sm:$0xf]
      %v564 = vld [vmem:[%s2 + $0x70] sm:$0xf]
      %v565 = vld [vmem:[%s2 + $0x74] sm:$0xf]
      %v566 = vld [vmem:[%s2 + $0x78] sm:$0xf]
      %v567 = vld [vmem:[%s2 + $0x7c] sm:$0xf]
      %v600 = vunpack.c.l.b16 %v536
      %v601 = vunpack.c.l.b16 %v537
      %v602 = vunpack.c.l.b16 %v538
      %v603 = vunpack.c.l.b16 %v539
      %v604 = vunpack.c.l.b16 %v540
      %v605 = vunpack.c.l.b16 %v541
      %v606 = vunpack.c.l.b16 %v542
      %v607 = vunpack.c.l.b16 %v543
      %v608 = vunpack.c.l.b16 %v544
      %v609 = vunpack.c.l.b16 %v545
      %v610 = vunpack.c.l.b16 %v546
      %v611 = vunpack.c.l.b16 %v547
      %v612 = vunpack.c.l.b16 %v548
      %v613 = vunpack.c.l.b16 %v549
      %v614 = vunpack.c.l.b16 %v550
      %v615 = vunpack.c.l.b16 %v551
      %v616 = vunpack.c.l.b16 %v552
      %v617 = vunpack.c.l.b16 %v553
      %v618 = vunpack.c.l.b16 %v554
      %v619 = vunpack.c.l.b16 %v555
      %v620 = vunpack.c.l.b16 %v556
      %v621 = vunpack.c.l.b16 %v557
      %v622 = vunpack.c.l.b16 %v558
      %v623 = vunpack.c.l.b16 %v559
      %v624 = vunpack.c.l.b16 %v560
      %v625 = vunpack.c.l.b16 %v561
      %v626 = vunpack.c.l.b16 %v562
      %v627 = vunpack.c.l.b16 %v563
      %v628 = vunpack.c.l.b16 %v564
      %v629 = vunpack.c.l.b16 %v565
      %v630 = vunpack.c.l.b16 %v566
      %v631 = vunpack.c.l.b16 %v567
      %v632 = vpack.c.b16 %v601, %v600
      %v633 = vpack.c.b16 %v603, %v602
      %v634 = vpack.c.b16 %v605, %v604
      %v635 = vpack.c.b16 %v607, %v606
      %v636 = vpack.c.b16 %v609, %v608
      %v637 = vpack.c.b16 %v611, %v610
      %v638 = vpack.c.b16 %v613, %v612
      %v639 = vpack.c.b16 %v615, %v614
      %v640 = vpack.c.b16 %v617, %v616
      %v641 = vpack.c.b16 %v619, %v618
      %v642 = vpack.c.b16 %v621, %v620
      %v643 = vpack.c.b16 %v623, %v622
      %v644 = vpack.c.b16 %v625, %v624
      %v645 = vpack.c.b16 %v627, %v626
      %v646 = vpack.c.b16 %v629, %v628
      %v647 = vpack.c.b16 %v631, %v630
      %664 = vmatprep.subr.bf16.mxu0 0
      %665 = vmatpush1.bf16.msra.mxu0 %v632
      %666 = vmatprep.subr.bf16.mxu0 0
      %667 = vmatpush1.bf16.msra.mxu0 %v633
      %668 = vmatprep.subr.bf16.mxu0 0
      %669 = vmatpush1.bf16.msra.mxu0 %v634
      %670 = vmatprep.subr.bf16.mxu0 0
      %671 = vmatpush1.bf16.msra.mxu0 %v635
      %672 = vmatprep.subr.bf16.mxu0 0
      %673 = vmatpush1.bf16.msra.mxu0 %v636
      %674 = vmatprep.subr.bf16.mxu0 0
      %675 = vmatpush1.bf16.msra.mxu0 %v637
      %676 = vmatprep.subr.bf16.mxu0 0
      %677 = vmatpush1.bf16.msra.mxu0 %v638
      %678 = vmatprep.subr.bf16.mxu0 0
      %679 = vmatpush1.bf16.msra.mxu0 %v639
      %680 = vmatprep.subr.bf16.mxu0 0
      %681 = vmatpush1.bf16.msra.mxu0 %v640
      %682 = vmatprep.subr.bf16.mxu0 0
      %683 = vmatpush1.bf16.msra.mxu0 %v641
      %684 = vmatprep.subr.bf16.mxu0 0
      %685 = vmatpush1.bf16.msra.mxu0 %v642
      %686 = vmatprep.subr.bf16.mxu0 0
      %687 = vmatpush1.bf16.msra.mxu0 %v643
      %688 = vmatprep.subr.bf16.mxu0 0
      %689 = vmatpush1.bf16.msra.mxu0 %v644
      %690 = vmatprep.subr.bf16.mxu0 0
      %691 = vmatpush1.bf16.msra.mxu0 %v645
      %692 = vmatprep.subr.bf16.mxu0 0
      %693 = vmatpush1.bf16.msra.mxu0 %v646
      %694 = vmatprep.subr.bf16.mxu0 0
      %695 = vmatpush1.bf16.msra.mxu0 %v647
      %696 = vmatprep.mubr.bf16.mxu0 %v527
      %697 = vmatmul.mubr.bf16.gmra.mrb[0].mxu0 %v526
      %v698 = vpop.f32.mrb[0].mxu0
      %v699 = vadd.f32 0.0, %v698
      %v700 = vpop.f32.mrb[0].mxu0
      %v701 = vpop.f32.mrb[0].mxu0
      %v702 = vadd.f32 0.0, %v701
      %v703 = vpop.f32.mrb[0].mxu0
      %704 = vmatprep.mubr.bf16.mxu0 %v529
      %705 = vmatmul.mubr.bf16.gmra.mrb[0].mxu0 %v528
      %v706 = vpop.f32.mrb[0].mxu0
      %v707 = vadd.f32 0.0, %v706
      %v708 = vpop.f32.mrb[0].mxu0
      %v709 = vpop.f32.mrb[0].mxu0
      %v710 = vadd.f32 0.0, %v709
      %v711 = vpop.f32.mrb[0].mxu0
      %712 = vmatprep.mubr.bf16.mxu0 %v530
      %713 = vmatmul.mubr.bf16.gmra.mrb[0].mxu0 %v527
      %v714 = vpop.f32.mrb[0].mxu0
      %v715 = vadd.f32 0.0, %v714
      %v716 = vpop.f32.mrb[0].mxu0
      %v717 = vpop.f32.mrb[0].mxu0
      %v718 = vadd.f32 0.0, %v717
      %v719 = vpop.f32.mrb[0].mxu0
      %720 = vmatprep.mubr.bf16.mxu0 %v531
      %721 = vmatmul.mubr.bf16.gmra.mrb[0].mxu0 %v529
      %v722 = vpop.f32.mrb[0].mxu0
      %v723 = vadd.f32 0.0, %v722
      %v724 = vpop.f32.mrb[0].mxu0
      %v725 = vpop.f32.mrb[0].mxu0
      %v726 = vadd.f32 0.0, %v725
      %v727 = vpop.f32.mrb[0].mxu0
      %728 = vmatprep.mubr.bf16.mxu0 %v532
      %729 = vmatmul.mubr.bf16.gmra.mrb[0].mxu0 %v530
      %v730 = vpop.f32.mrb[0].mxu0
      %v731 = vadd.f32 0.0, %v730
      %v732 = vpop.f32.mrb[0].mxu0
      %v733 = vpop.f32.mrb[0].mxu0
      %v734 = vadd.f32 0.0, %v733
      %v735 = vpop.f32.mrb[0].mxu0
      %736 = vmatprep.mubr.bf16.mxu0 %v533
      %737 = vmatmul.mubr.bf16.gmra.mrb[0].mxu0 %v531
      %v738 = vpop.f32.mrb[0].mxu0
      %v739 = vadd.f32 0.0, %v738
      %v740 = vpop.f32.mrb[0].mxu0
      %v741 = vpop.f32.mrb[0].mxu0
      %v742 = vadd.f32 0.0, %v741
      %v743 = vpop.f32.mrb[0].mxu0
      %744 = vmatprep.mubr.bf16.mxu0 %v534
      %745 = vmatmul.mubr.bf16.gmra.mrb[0].mxu0 %v532
      %v746 = vpop.f32.mrb[0].mxu0
      %v747 = vadd.f32 0.0, %v746
      %v748 = vpop.f32.mrb[0].mxu0
      %v749 = vpop.f32.mrb[0].mxu0
      %v750 = vadd.f32 0.0, %v749
      %v751 = vpop.f32.mrb[0].mxu0
      %752 = vmatprep.mubr.bf16.mxu0 %v535
      %753 = vmatmul.mubr.bf16.gmra.mrb[0].mxu0 %v533
      %v754 = vpop.f32.mrb[0].mxu0
      %v755 = vadd.f32 0.0, %v754
      %v756 = vpop.f32.mrb[0].mxu0
      %v757 = vpop.f32.mrb[0].mxu0
      %v758 = vadd.f32 0.0, %v757
      %v759 = vpop.f32.mrb[0].mxu0
      %760 = vdwg.mxu0
      %v761 = vld [vmem:[%s3] sm:$0x1]
      %v762 = vlaneseq
      %v763 = vshrl.u32 %v762, 7
      %v764 = vsub.s32 0, %v763
      %v765 = vrot.slane %v761, %v764
      %v766 = vadd.f32 %v699, %v765
      %v767 = vadd.f32 %v702, %v765
      %v768 = vadd.f32 %v707, %v765
      %v769 = vadd.f32 %v710, %v765
      %v770 = vadd.f32 %v715, %v765
      %v771 = vadd.f32 %v718, %v765
      %v772 = vadd.f32 %v723, %v765
      %v773 = vadd.f32 %v726, %v765
      %v774 = vadd.f32 %v731, %v765
      %v775 = vadd.f32 %v734, %v765
      %v776 = vadd.f32 %v739, %v765
      %v777 = vadd.f32 %v742, %v765
      %v778 = vadd.f32 %v747, %v765
      %v779 = vadd.f32 %v750, %v765
      %v780 = vadd.f32 %v755, %v765
      %v781 = vadd.f32 %v758, %v765
      %v782 = vld [vmem:[%s3 + $0x2] sm:$0x1]
      %v783 = vld [vmem:[%s3 + $0x3] sm:$0x1]
      %v784 = vsel %vm463, %v766, 0.0
      %785 = vadd.xlane.f32.xlu0 %v784
      %v786 = vpop.xlane.xlu0 %785
      %v787 = vsel %vm463, %v767, 0.0
      %788 = vadd.xlane.f32.xlu0 %v787
      %v789 = vpop.xlane.xlu0 %788
      %v790 = vsel %vm463, %v768, 0.0
      %791 = vadd.xlane.f32.xlu0 %v790
      %v792 = vpop.xlane.xlu0 %791
      %v793 = vsel %vm463, %v769, 0.0
      %794 = vadd.xlane.f32.xlu0 %v793
      %v795 = vpop.xlane.xlu0 %794
      %v796 = vsel %vm463, %v770, 0.0
      %797 = vadd.xlane.f32.xlu0 %v796
      %v798 = vpop.xlane.xlu0 %797
      %v799 = vsel %vm463, %v771, 0.0
      %800 = vadd.xlane.f32.xlu0 %v799
      %v801 = vpop.xlane.xlu0 %800
      %v802 = vsel %vm463, %v772, 0.0
      %803 = vadd.xlane.f32.xlu0 %v802
      %v804 = vpop.xlane.xlu0 %803
      %v805 = vsel %vm463, %v773, 0.0
      %806 = vadd.xlane.f32.xlu0 %v805
      %v807 = vpop.xlane.xlu0 %806
      %v808 = vsel %vm463, %v774, 0.0
      %809 = vadd.xlane.f32.xlu0 %v808
      %v810 = vpop.xlane.xlu0 %809
      %v811 = vsel %vm463, %v775, 0.0
      %812 = vadd.xlane.f32.xlu0 %v811
      %v813 = vpop.xlane.xlu0 %812
      %v814 = vsel %vm463, %v776, 0.0
      %815 = vadd.xlane.f32.xlu0 %v814
      %v816 = vpop.xlane.xlu0 %815
      %v817 = vsel %vm463, %v777, 0.0
      %818 = vadd.xlane.f32.xlu0 %v817
      %v819 = vpop.xlane.xlu0 %818
      %v820 = vsel %vm463, %v778, 0.0
      %821 = vadd.xlane.f32.xlu0 %v820
      %v822 = vpop.xlane.xlu0 %821
      %v823 = vsel %vm463, %v779, 0.0
      %824 = vadd.xlane.f32.xlu0 %v823
      %v825 = vpop.xlane.xlu0 %824
      %v826 = vsel %vm463, %v780, 0.0
      %827 = vadd.xlane.f32.xlu0 %v826
      %v828 = vpop.xlane.xlu0 %827
      %v829 = vsel %vm463, %v781, 0.0
      %830 = vadd.xlane.f32.xlu0 %v829
      %v831 = vpop.xlane.xlu0 %830
      %v832 = vrcp.pop 32.0
      %v833 = vmul.f32 %v786, %v832
      %v834 = vmul.f32 %v789, %v832
      %v835 = vmul.f32 %v792, %v832
      %v836 = vmul.f32 %v795, %v832
      %v837 = vmul.f32 %v798, %v832
      %v838 = vmul.f32 %v801, %v832
      %v839 = vmul.f32 %v804, %v832
      %v840 = vmul.f32 %v807, %v832
      %v841 = vmul.f32 %v810, %v832
      %v842 = vmul.f32 %v813, %v832
      %v843 = vmul.f32 %v816, %v832
      %v844 = vmul.f32 %v819, %v832
      %v845 = vmul.f32 %v822, %v832
      %v846 = vmul.f32 %v825, %v832
      %v847 = vmul.f32 %v828, %v832
      %v848 = vmul.f32 %v831, %v832
      %v849 = vsub.f32 %v766, %v833
      %v850 = vsub.f32 %v767, %v834
      %v851 = vsub.f32 %v768, %v835
      %v852 = vsub.f32 %v769, %v836
      %v853 = vsub.f32 %v770, %v837
      %v854 = vsub.f32 %v771, %v838
      %v855 = vsub.f32 %v772, %v839
      %v856 = vsub.f32 %v773, %v840
      %v857 = vsub.f32 %v774, %v841
      %v858 = vsub.f32 %v775, %v842
      %v859 = vsub.f32 %v776, %v843
      %v860 = vsub.f32 %v777, %v844
      %v861 = vsub.f32 %v778, %v845
      %v862 = vsub.f32 %v779, %v846
      %v863 = vsub.f32 %v780, %v847
      %v864 = vsub.f32 %v781, %v848
      %v865 = vmul.f32 %v849, %v849
      %v866 = vmul.f32 %v850, %v850
      %v867 = vmul.f32 %v851, %v851
      %v868 = vmul.f32 %v852, %v852
      %v869 = vmul.f32 %v853, %v853
      %v870 = vmul.f32 %v854, %v854
      %v871 = vmul.f32 %v855, %v855
      %v872 = vmul.f32 %v856, %v856
      %v873 = vmul.f32 %v857, %v857
      %v874 = vmul.f32 %v858, %v858
      %v875 = vmul.f32 %v859, %v859
      %v876 = vmul.f32 %v860, %v860
      %v877 = vmul.f32 %v861, %v861
      %v878 = vmul.f32 %v862, %v862
      %v879 = vmul.f32 %v863, %v863
      %v880 = vmul.f32 %v864, %v864
      %v881 = vsel %vm463, %v865, 0.0
      %882 = vadd.xlane.f32.xlu0 %v881
      %v883 = vpop.xlane.xlu0 %882
      %v884 = vsel %vm463, %v866, 0.0
      %885 = vadd.xlane.f32.xlu0 %v884
      %v886 = vpop.xlane.xlu0 %885
      %v887 = vsel %vm463, %v867, 0.0
      %888 = vadd.xlane.f32.xlu0 %v887
      %v889 = vpop.xlane.xlu0 %888
      %v890 = vsel %vm463, %v868, 0.0
      %891 = vadd.xlane.f32.xlu0 %v890
      %v892 = vpop.xlane.xlu0 %891
      %v893 = vsel %vm463, %v869, 0.0
      %894 = vadd.xlane.f32.xlu0 %v893
      %v895 = vpop.xlane.xlu0 %894
      %v896 = vsel %vm463, %v870, 0.0
      %897 = vadd.xlane.f32.xlu0 %v896
      %v898 = vpop.xlane.xlu0 %897
      %v899 = vsel %vm463, %v871, 0.0
      %900 = vadd.xlane.f32.xlu0 %v899
      %v901 = vpop.xlane.xlu0 %900
      %v902 = vsel %vm463, %v872, 0.0
      %903 = vadd.xlane.f32.xlu0 %v902
      %v904 = vpop.xlane.xlu0 %903
      %v905 = vsel %vm463, %v873, 0.0
      %906 = vadd.xlane.f32.xlu0 %v905
      %v907 = vpop.xlane.xlu0 %906
      %v908 = vsel %vm463, %v874, 0.0
      %909 = vadd.xlane.f32.xlu0 %v908
      %v910 = vpop.xlane.xlu0 %909
      %v911 = vsel %vm463, %v875, 0.0
      %912 = vadd.xlane.f32.xlu0 %v911
      %v913 = vpop.xlane.xlu0 %912
      %v914 = vsel %vm463, %v876, 0.0
      %915 = vadd.xlane.f32.xlu0 %v914
      %v916 = vpop.xlane.xlu0 %915
      %v917 = vsel %vm463, %v877, 0.0
      %918 = vadd.xlane.f32.xlu0 %v917
      %v919 = vpop.xlane.xlu0 %918
      %v920 = vsel %vm463, %v878, 0.0
      %921 = vadd.xlane.f32.xlu0 %v920
      %v922 = vpop.xlane.xlu0 %921
      %v923 = vsel %vm463, %v879, 0.0
      %924 = vadd.xlane.f32.xlu0 %v923
      %v925 = vpop.xlane.xlu0 %924
      %v926 = vsel %vm463, %v880, 0.0
      %927 = vadd.xlane.f32.xlu0 %v926
      %v928 = vpop.xlane.xlu0 %927
      %v929 = vmul.f32 %v883, %v832
      %v930 = vmul.f32 %v886, %v832
      %v931 = vmul.f32 %v889, %v832
      %v932 = vmul.f32 %v892, %v832
      %v933 = vmul.f32 %v895, %v832
      %v934 = vmul.f32 %v898, %v832
      %v935 = vmul.f32 %v901, %v832
      %v936 = vmul.f32 %v904, %v832
      %v937 = vmul.f32 %v907, %v832
      %v938 = vmul.f32 %v910, %v832
      %v939 = vmul.f32 %v913, %v832
      %v940 = vmul.f32 %v916, %v832
      %v941 = vmul.f32 %v919, %v832
      %v942 = vmul.f32 %v922, %v832
      %v943 = vmul.f32 %v925, %v832
      %v944 = vmul.f32 %v928, %v832
      %v945 = vadd.f32 %v929, 1e-05
      %v946 = vadd.f32 %v930, 1e-05
      %v947 = vadd.f32 %v931, 1e-05
      %v948 = vadd.f32 %v932, 1e-05
      %v949 = vadd.f32 %v933, 1e-05
      %v950 = vadd.f32 %v934, 1e-05
      %v951 = vadd.f32 %v935, 1e-05
      %v952 = vadd.f32 %v936, 1e-05
      %v953 = vadd.f32 %v937, 1e-05
      %v954 = vadd.f32 %v938, 1e-05
      %v955 = vadd.f32 %v939, 1e-05
      %v956 = vadd.f32 %v940, 1e-05
      %v957 = vadd.f32 %v941, 1e-05
      %v958 = vadd.f32 %v942, 1e-05
      %v959 = vadd.f32 %v943, 1e-05
      %v960 = vadd.f32 %v944, 1e-05
      %v961 = vrsqrt.pop %v945
      %v962 = vrsqrt.pop %v946
      %v963 = vrsqrt.pop %v947
      %v964 = vrsqrt.pop %v948
      %v965 = vrsqrt.pop %v949
      %v966 = vrsqrt.pop %v950
      %v967 = vrsqrt.pop %v951
      %v968 = vrsqrt.pop %v952
      %v969 = vrsqrt.pop %v953
      %v970 = vrsqrt.pop %v954
      %v971 = vrsqrt.pop %v955
      %v972 = vrsqrt.pop %v956
      %v973 = vrsqrt.pop %v957
      %v974 = vrsqrt.pop %v958
      %v975 = vrsqrt.pop %v959
      %v976 = vrsqrt.pop %v960
      %v977 = vmul.f32 %v849, %v961
      %v978 = vmul.f32 %v850, %v962
      %v979 = vmul.f32 %v851, %v963
      %v980 = vmul.f32 %v852, %v964
      %v981 = vmul.f32 %v853, %v965
      %v982 = vmul.f32 %v854, %v966
      %v983 = vmul.f32 %v855, %v967
      %v984 = vmul.f32 %v856, %v968
      %v985 = vmul.f32 %v857, %v969
      %v986 = vmul.f32 %v858, %v970
      %v987 = vmul.f32 %v859, %v971
      %v988 = vmul.f32 %v860, %v972
      %v989 = vmul.f32 %v861, %v973
      %v990 = vmul.f32 %v862, %v974
      %v991 = vmul.f32 %v863, %v975
      %v992 = vmul.f32 %v864, %v976
      %v993 = vlaneseq
      %v994 = vshrl.u32 %v993, 7
      %v995 = vsub.s32 0, %v994
      %v996 = vrot.slane %v782, %v995
      %v997 = vmul.f32 %v977, %v996
      %v998 = vmul.f32 %v978, %v996
      %v999 = vmul.f32 %v979, %v996
      %v1000 = vmul.f32 %v980, %v996
      %v1001 = vmul.f32 %v981, %v996
      %v1002 = vmul.f32 %v982, %v996
      %v1003 = vmul.f32 %v983, %v996
      %v1004 = vmul.f32 %v984, %v996
      %v1005 = vmul.f32 %v985, %v996
      %v1006 = vmul.f32 %v986, %v996
      %v1007 = vmul.f32 %v987, %v996
      %v1008 = vmul.f32 %v988, %v996
      %v1009 = vmul.f32 %v989, %v996
      %v1010 = vmul.f32 %v990, %v996
      %v1011 = vmul.f32 %v991, %v996
      %v1012 = vmul.f32 %v992, %v996
      %v1013 = vlaneseq
      %v1014 = vshrl.u32 %v1013, 7
      %v1015 = vsub.s32 0, %v1014
      %v1016 = vrot.slane %v783, %v1015
      %v1017 = vadd.f32 %v997, %v1016
      %v1018 = vadd.f32 %v998, %v1016
      %v1019 = vadd.f32 %v999, %v1016
      %v1020 = vadd.f32 %v1000, %v1016
      %v1021 = vadd.f32 %v1001, %v1016
      %v1022 = vadd.f32 %v1002, %v1016
      %v1023 = vadd.f32 %v1003, %v1016
      %v1024 = vadd.f32 %v1004, %v1016
      %v1025 = vadd.f32 %v1005, %v1016
      %v1026 = vadd.f32 %v1006, %v1016
      %v1027 = vadd.f32 %v1007, %v1016
      %v1028 = vadd.f32 %v1008, %v1016
      %v1029 = vadd.f32 %v1009, %v1016
      %v1030 = vadd.f32 %v1010, %v1016
      %v1031 = vadd.f32 %v1011, %v1016
      %v1032 = vadd.f32 %v1012, %v1016
      %v1033 = vld [vmem:[%s3 + $0x1] sm:$0x1]
      %v1034 = vlaneseq
      %v1035 = vshrl.u32 %v1034, 7
      %v1036 = vsub.s32 0, %v1035
      %v1037 = vrot.slane %v1033, %v1036
      %1039 = vrot.lane.b32.xlu0 %v1037, 32
      %v1040 = vpop.permute.xlu0 %1039
      %v1042 = vadd.f32 %v699, %v1040
      %v1043 = vadd.f32 %v702, %v1040
      %v1044 = vadd.f32 %v707, %v1040
      %v1045 = vadd.f32 %v710, %v1040
      %v1046 = vadd.f32 %v715, %v1040
      %v1047 = vadd.f32 %v718, %v1040
      %v1048 = vadd.f32 %v723, %v1040
      %v1049 = vadd.f32 %v726, %v1040
      %v1050 = vadd.f32 %v731, %v1040
      %v1051 = vadd.f32 %v734, %v1040
      %v1052 = vadd.f32 %v739, %v1040
      %v1053 = vadd.f32 %v742, %v1040
      %v1054 = vadd.f32 %v747, %v1040
      %v1055 = vadd.f32 %v750, %v1040
      %v1056 = vadd.f32 %v755, %v1040
      %v1057 = vadd.f32 %v758, %v1040
      %v1058 = vld [vmem:[%s3 + $0x4] sm:$0x1]
      %v1059 = vld [vmem:[%s3 + $0x5] sm:$0x1]
      %1076 = vrot.lane.b32.xlu0 %v1042, 96
      %v1077 = vpop.permute.xlu0 %1076
      %1078 = vrot.lane.b32.xlu0 %v1043, 96
      %v1079 = vpop.permute.xlu0 %1078
      %1080 = vrot.lane.b32.xlu0 %v1044, 96
      %v1081 = vpop.permute.xlu0 %1080
      %1082 = vrot.lane.b32.xlu0 %v1045, 96
      %v1083 = vpop.permute.xlu0 %1082
      %1084 = vrot.lane.b32.xlu0 %v1046, 96
      %v1085 = vpop.permute.xlu0 %1084
      %1086 = vrot.lane.b32.xlu0 %v1047, 96
      %v1087 = vpop.permute.xlu0 %1086
      %1088 = vrot.lane.b32.xlu0 %v1048, 96
      %v1089 = vpop.permute.xlu0 %1088
      %1090 = vrot.lane.b32.xlu0 %v1049, 96
      %v1091 = vpop.permute.xlu0 %1090
      %1092 = vrot.lane.b32.xlu0 %v1050, 96
      %v1093 = vpop.permute.xlu0 %1092
      %1094 = vrot.lane.b32.xlu0 %v1051, 96
      %v1095 = vpop.permute.xlu0 %1094
      %1096 = vrot.lane.b32.xlu0 %v1052, 96
      %v1097 = vpop.permute.xlu0 %1096
      %1098 = vrot.lane.b32.xlu0 %v1053, 96
      %v1099 = vpop.permute.xlu0 %1098
      %1100 = vrot.lane.b32.xlu0 %v1054, 96
      %v1101 = vpop.permute.xlu0 %1100
      %1102 = vrot.lane.b32.xlu0 %v1055, 96
      %v1103 = vpop.permute.xlu0 %1102
      %1104 = vrot.lane.b32.xlu0 %v1056, 96
      %v1105 = vpop.permute.xlu0 %1104
      %1106 = vrot.lane.b32.xlu0 %v1057, 96
      %v1107 = vpop.permute.xlu0 %1106
      %v1124 = vsel %vm463, %v1077, 0.0
      %1125 = vadd.xlane.f32.xlu0 %v1124
      %v1126 = vpop.xlane.xlu0 %1125
      %v1127 = vsel %vm463, %v1079, 0.0
      %1128 = vadd.xlane.f32.xlu0 %v1127
      %v1129 = vpop.xlane.xlu0 %1128
      %v1130 = vsel %vm463, %v1081, 0.0
      %1131 = vadd.xlane.f32.xlu0 %v1130
      %v1132 = vpop.xlane.xlu0 %1131
      %v1133 = vsel %vm463, %v1083, 0.0
      %1134 = vadd.xlane.f32.xlu0 %v1133
      %v1135 = vpop.xlane.xlu0 %1134
      %v1136 = vsel %vm463, %v1085, 0.0
      %1137 = vadd.xlane.f32.xlu0 %v1136
      %v1138 = vpop.xlane.xlu0 %1137
      %v1139 = vsel %vm463, %v1087, 0.0
      %1140 = vadd.xlane.f32.xlu0 %v1139
      %v1141 = vpop.xlane.xlu0 %1140
      %v1142 = vsel %vm463, %v1089, 0.0
      %1143 = vadd.xlane.f32.xlu0 %v1142
      %v1144 = vpop.xlane.xlu0 %1143
      %v1145 = vsel %vm463, %v1091, 0.0
      %1146 = vadd.xlane.f32.xlu0 %v1145
      %v1147 = vpop.xlane.xlu0 %1146
      %v1148 = vsel %vm463, %v1093, 0.0
      %1149 = vadd.xlane.f32.xlu0 %v1148
      %v1150 = vpop.xlane.xlu0 %1149
      %v1151 = vsel %vm463, %v1095, 0.0
      %1152 = vadd.xlane.f32.xlu0 %v1151
      %v1153 = vpop.xlane.xlu0 %1152
      %v1154 = vsel %vm463, %v1097, 0.0
      %1155 = vadd.xlane.f32.xlu0 %v1154
      %v1156 = vpop.xlane.xlu0 %1155
      %v1157 = vsel %vm463, %v1099, 0.0
      %1158 = vadd.xlane.f32.xlu0 %v1157
      %v1159 = vpop.xlane.xlu0 %1158
      %v1160 = vsel %vm463, %v1101, 0.0
      %1161 = vadd.xlane.f32.xlu0 %v1160
      %v1162 = vpop.xlane.xlu0 %1161
      %v1163 = vsel %vm463, %v1103, 0.0
      %1164 = vadd.xlane.f32.xlu0 %v1163
      %v1165 = vpop.xlane.xlu0 %1164
      %v1166 = vsel %vm463, %v1105, 0.0
      %1167 = vadd.xlane.f32.xlu0 %v1166
      %v1168 = vpop.xlane.xlu0 %1167
      %v1169 = vsel %vm463, %v1107, 0.0
      %1170 = vadd.xlane.f32.xlu0 %v1169
      %v1171 = vpop.xlane.xlu0 %1170
      %v1172 = vmul.f32 %v1126, %v832
      %v1173 = vmul.f32 %v1129, %v832
      %v1174 = vmul.f32 %v1132, %v832
      %v1175 = vmul.f32 %v1135, %v832
      %v1176 = vmul.f32 %v1138, %v832
      %v1177 = vmul.f32 %v1141, %v832
      %v1178 = vmul.f32 %v1144, %v832
      %v1179 = vmul.f32 %v1147, %v832
      %v1180 = vmul.f32 %v1150, %v832
      %v1181 = vmul.f32 %v1153, %v832
      %v1182 = vmul.f32 %v1156, %v832
      %v1183 = vmul.f32 %v1159, %v832
      %v1184 = vmul.f32 %v1162, %v832
      %v1185 = vmul.f32 %v1165, %v832
      %v1186 = vmul.f32 %v1168, %v832
      %v1187 = vmul.f32 %v1171, %v832
      %v1188 = vsub.f32 %v1042, %v1172
      %v1189 = vsub.f32 %v1043, %v1173
      %v1190 = vsub.f32 %v1044, %v1174
      %v1191 = vsub.f32 %v1045, %v1175
      %v1192 = vsub.f32 %v1046, %v1176
      %v1193 = vsub.f32 %v1047, %v1177
      %v1194 = vsub.f32 %v1048, %v1178
      %v1195 = vsub.f32 %v1049, %v1179
      %v1196 = vsub.f32 %v1050, %v1180
      %v1197 = vsub.f32 %v1051, %v1181
      %v1198 = vsub.f32 %v1052, %v1182
      %v1199 = vsub.f32 %v1053, %v1183
      %v1200 = vsub.f32 %v1054, %v1184
      %v1201 = vsub.f32 %v1055, %v1185
      %v1202 = vsub.f32 %v1056, %v1186
      %v1203 = vsub.f32 %v1057, %v1187
      %v1204 = vmul.f32 %v1188, %v1188
      %v1205 = vmul.f32 %v1189, %v1189
      %v1206 = vmul.f32 %v1190, %v1190
      %v1207 = vmul.f32 %v1191, %v1191
      %v1208 = vmul.f32 %v1192, %v1192
      %v1209 = vmul.f32 %v1193, %v1193
      %v1210 = vmul.f32 %v1194, %v1194
      %v1211 = vmul.f32 %v1195, %v1195
      %v1212 = vmul.f32 %v1196, %v1196
      %v1213 = vmul.f32 %v1197, %v1197
      %v1214 = vmul.f32 %v1198, %v1198
      %v1215 = vmul.f32 %v1199, %v1199
      %v1216 = vmul.f32 %v1200, %v1200
      %v1217 = vmul.f32 %v1201, %v1201
      %v1218 = vmul.f32 %v1202, %v1202
      %v1219 = vmul.f32 %v1203, %v1203
      %1236 = vrot.lane.b32.xlu0 %v1204, 96
      %v1237 = vpop.permute.xlu0 %1236
      %1238 = vrot.lane.b32.xlu0 %v1205, 96
      %v1239 = vpop.permute.xlu0 %1238
      %1240 = vrot.lane.b32.xlu0 %v1206, 96
      %v1241 = vpop.permute.xlu0 %1240
      %1242 = vrot.lane.b32.xlu0 %v1207, 96
      %v1243 = vpop.permute.xlu0 %1242
      %1244 = vrot.lane.b32.xlu0 %v1208, 96
      %v1245 = vpop.permute.xlu0 %1244
      %1246 = vrot.lane.b32.xlu0 %v1209, 96
      %v1247 = vpop.permute.xlu0 %1246
      %1248 = vrot.lane.b32.xlu0 %v1210, 96
      %v1249 = vpop.permute.xlu0 %1248
      %1250 = vrot.lane.b32.xlu0 %v1211, 96
      %v1251 = vpop.permute.xlu0 %1250
      %1252 = vrot.lane.b32.xlu0 %v1212, 96
      %v1253 = vpop.permute.xlu0 %1252
      %1254 = vrot.lane.b32.xlu0 %v1213, 96
      %v1255 = vpop.permute.xlu0 %1254
      %1256 = vrot.lane.b32.xlu0 %v1214, 96
      %v1257 = vpop.permute.xlu0 %1256
      %1258 = vrot.lane.b32.xlu0 %v1215, 96
      %v1259 = vpop.permute.xlu0 %1258
      %1260 = vrot.lane.b32.xlu0 %v1216, 96
      %v1261 = vpop.permute.xlu0 %1260
      %1262 = vrot.lane.b32.xlu0 %v1217, 96
      %v1263 = vpop.permute.xlu0 %1262
      %1264 = vrot.lane.b32.xlu0 %v1218, 96
      %v1265 = vpop.permute.xlu0 %1264
      %1266 = vrot.lane.b32.xlu0 %v1219, 96
      %v1267 = vpop.permute.xlu0 %1266
      %v1284 = vsel %vm463, %v1237, 0.0
      %1285 = vadd.xlane.f32.xlu0 %v1284
      %v1286 = vpop.xlane.xlu0 %1285
      %v1287 = vsel %vm463, %v1239, 0.0
      %1288 = vadd.xlane.f32.xlu0 %v1287
      %v1289 = vpop.xlane.xlu0 %1288
      %v1290 = vsel %vm463, %v1241, 0.0
      %1291 = vadd.xlane.f32.xlu0 %v1290
      %v1292 = vpop.xlane.xlu0 %1291
      %v1293 = vsel %vm463, %v1243, 0.0
      %1294 = vadd.xlane.f32.xlu0 %v1293
      %v1295 = vpop.xlane.xlu0 %1294
      %v1296 = vsel %vm463, %v1245, 0.0
      %1297 = vadd.xlane.f32.xlu0 %v1296
      %v1298 = vpop.xlane.xlu0 %1297
      %v1299 = vsel %vm463, %v1247, 0.0
      %1300 = vadd.xlane.f32.xlu0 %v1299
      %v1301 = vpop.xlane.xlu0 %1300
      %v1302 = vsel %vm463, %v1249, 0.0
      %1303 = vadd.xlane.f32.xlu0 %v1302
      %v1304 = vpop.xlane.xlu0 %1303
      %v1305 = vsel %vm463, %v1251, 0.0
      %1306 = vadd.xlane.f32.xlu0 %v1305
      %v1307 = vpop.xlane.xlu0 %1306
      %v1308 = vsel %vm463, %v1253, 0.0
      %1309 = vadd.xlane.f32.xlu0 %v1308
      %v1310 = vpop.xlane.xlu0 %1309
      %v1311 = vsel %vm463, %v1255, 0.0
      %1312 = vadd.xlane.f32.xlu0 %v1311
      %v1313 = vpop.xlane.xlu0 %1312
      %v1314 = vsel %vm463, %v1257, 0.0
      %1315 = vadd.xlane.f32.xlu0 %v1314
      %v1316 = vpop.xlane.xlu0 %1315
      %v1317 = vsel %vm463, %v1259, 0.0
      %1318 = vadd.xlane.f32.xlu0 %v1317
      %v1319 = vpop.xlane.xlu0 %1318
      %v1320 = vsel %vm463, %v1261, 0.0
      %1321 = vadd.xlane.f32.xlu0 %v1320
      %v1322 = vpop.xlane.xlu0 %1321
      %v1323 = vsel %vm463, %v1263, 0.0
      %1324 = vadd.xlane.f32.xlu0 %v1323
      %v1325 = vpop.xlane.xlu0 %1324
      %v1326 = vsel %vm463, %v1265, 0.0
      %1327 = vadd.xlane.f32.xlu0 %v1326
      %v1328 = vpop.xlane.xlu0 %1327
      %v1329 = vsel %vm463, %v1267, 0.0
      %1330 = vadd.xlane.f32.xlu0 %v1329
      %v1331 = vpop.xlane.xlu0 %1330
      %v1332 = vmul.f32 %v1286, %v832
      %v1333 = vmul.f32 %v1289, %v832
      %v1334 = vmul.f32 %v1292, %v832
      %v1335 = vmul.f32 %v1295, %v832
      %v1336 = vmul.f32 %v1298, %v832
      %v1337 = vmul.f32 %v1301, %v832
      %v1338 = vmul.f32 %v1304, %v832
      %v1339 = vmul.f32 %v1307, %v832
      %v1340 = vmul.f32 %v1310, %v832
      %v1341 = vmul.f32 %v1313, %v832
      %v1342 = vmul.f32 %v1316, %v832
      %v1343 = vmul.f32 %v1319, %v832
      %v1344 = vmul.f32 %v1322, %v832
      %v1345 = vmul.f32 %v1325, %v832
      %v1346 = vmul.f32 %v1328, %v832
      %v1347 = vmul.f32 %v1331, %v832
      %v1348 = vadd.f32 %v1332, 1e-05
      %v1349 = vadd.f32 %v1333, 1e-05
      %v1350 = vadd.f32 %v1334, 1e-05
      %v1351 = vadd.f32 %v1335, 1e-05
      %v1352 = vadd.f32 %v1336, 1e-05
      %v1353 = vadd.f32 %v1337, 1e-05
      %v1354 = vadd.f32 %v1338, 1e-05
      %v1355 = vadd.f32 %v1339, 1e-05
      %v1356 = vadd.f32 %v1340, 1e-05
      %v1357 = vadd.f32 %v1341, 1e-05
      %v1358 = vadd.f32 %v1342, 1e-05
      %v1359 = vadd.f32 %v1343, 1e-05
      %v1360 = vadd.f32 %v1344, 1e-05
      %v1361 = vadd.f32 %v1345, 1e-05
      %v1362 = vadd.f32 %v1346, 1e-05
      %v1363 = vadd.f32 %v1347, 1e-05
      %v1364 = vrsqrt.pop %v1348
      %v1365 = vrsqrt.pop %v1349
      %v1366 = vrsqrt.pop %v1350
      %v1367 = vrsqrt.pop %v1351
      %v1368 = vrsqrt.pop %v1352
      %v1369 = vrsqrt.pop %v1353
      %v1370 = vrsqrt.pop %v1354
      %v1371 = vrsqrt.pop %v1355
      %v1372 = vrsqrt.pop %v1356
      %v1373 = vrsqrt.pop %v1357
      %v1374 = vrsqrt.pop %v1358
      %v1375 = vrsqrt.pop %v1359
      %v1376 = vrsqrt.pop %v1360
      %v1377 = vrsqrt.pop %v1361
      %v1378 = vrsqrt.pop %v1362
      %v1379 = vrsqrt.pop %v1363
      %v1380 = vmul.f32 %v1188, %v1364
      %v1381 = vmul.f32 %v1189, %v1365
      %v1382 = vmul.f32 %v1190, %v1366
      %v1383 = vmul.f32 %v1191, %v1367
      %v1384 = vmul.f32 %v1192, %v1368
      %v1385 = vmul.f32 %v1193, %v1369
      %v1386 = vmul.f32 %v1194, %v1370
      %v1387 = vmul.f32 %v1195, %v1371
      %v1388 = vmul.f32 %v1196, %v1372
      %v1389 = vmul.f32 %v1197, %v1373
      %v1390 = vmul.f32 %v1198, %v1374
      %v1391 = vmul.f32 %v1199, %v1375
      %v1392 = vmul.f32 %v1200, %v1376
      %v1393 = vmul.f32 %v1201, %v1377
      %v1394 = vmul.f32 %v1202, %v1378
      %v1395 = vmul.f32 %v1203, %v1379
      %v1396 = vlaneseq
      %v1397 = vshrl.u32 %v1396, 7
      %v1398 = vsub.s32 0, %v1397
      %v1399 = vrot.slane %v1058, %v1398
      %1401 = vrot.lane.b32.xlu0 %v1399, 32
      %v1402 = vpop.permute.xlu0 %1401
      %v1404 = vmul.f32 %v1380, %v1402
      %v1405 = vmul.f32 %v1381, %v1402
      %v1406 = vmul.f32 %v1382, %v1402
      %v1407 = vmul.f32 %v1383, %v1402
      %v1408 = vmul.f32 %v1384, %v1402
      %v1409 = vmul.f32 %v1385, %v1402
      %v1410 = vmul.f32 %v1386, %v1402
      %v1411 = vmul.f32 %v1387, %v1402
      %v1412 = vmul.f32 %v1388, %v1402
      %v1413 = vmul.f32 %v1389, %v1402
      %v1414 = vmul.f32 %v1390, %v1402
      %v1415 = vmul.f32 %v1391, %v1402
      %v1416 = vmul.f32 %v1392, %v1402
      %v1417 = vmul.f32 %v1393, %v1402
      %v1418 = vmul.f32 %v1394, %v1402
      %v1419 = vmul.f32 %v1395, %v1402
      %v1420 = vlaneseq
      %v1421 = vshrl.u32 %v1420, 7
      %v1422 = vsub.s32 0, %v1421
      %v1423 = vrot.slane %v1059, %v1422
      %1425 = vrot.lane.b32.xlu0 %v1423, 32
      %v1426 = vpop.permute.xlu0 %1425
      %v1428 = vadd.f32 %v1404, %v1426
      %v1429 = vadd.f32 %v1405, %v1426
      %v1430 = vadd.f32 %v1406, %v1426
      %v1431 = vadd.f32 %v1407, %v1426
      %v1432 = vadd.f32 %v1408, %v1426
      %v1433 = vadd.f32 %v1409, %v1426
      %v1434 = vadd.f32 %v1410, %v1426
      %v1435 = vadd.f32 %v1411, %v1426
      %v1436 = vadd.f32 %v1412, %v1426
      %v1437 = vadd.f32 %v1413, %v1426
      %v1438 = vadd.f32 %v1414, %v1426
      %v1439 = vadd.f32 %v1415, %v1426
      %v1440 = vadd.f32 %v1416, %v1426
      %v1441 = vadd.f32 %v1417, %v1426
      %v1442 = vadd.f32 %v1418, %v1426
      %v1443 = vadd.f32 %v1419, %v1426
      %1460 = vrot.lane.b32.xlu0 %v1428, 96
      %v1461 = vpop.permute.xlu0 %1460
      %1462 = vrot.lane.b32.xlu0 %v1429, 96
      %v1463 = vpop.permute.xlu0 %1462
      %1464 = vrot.lane.b32.xlu0 %v1430, 96
      %v1465 = vpop.permute.xlu0 %1464
      %1466 = vrot.lane.b32.xlu0 %v1431, 96
      %v1467 = vpop.permute.xlu0 %1466
      %1468 = vrot.lane.b32.xlu0 %v1432, 96
      %v1469 = vpop.permute.xlu0 %1468
      %1470 = vrot.lane.b32.xlu0 %v1433, 96
      %v1471 = vpop.permute.xlu0 %1470
      %1472 = vrot.lane.b32.xlu0 %v1434, 96
      %v1473 = vpop.permute.xlu0 %1472
      %1474 = vrot.lane.b32.xlu0 %v1435, 96
      %v1475 = vpop.permute.xlu0 %1474
      %1476 = vrot.lane.b32.xlu0 %v1436, 96
      %v1477 = vpop.permute.xlu0 %1476
      %1478 = vrot.lane.b32.xlu0 %v1437, 96
      %v1479 = vpop.permute.xlu0 %1478
      %1480 = vrot.lane.b32.xlu0 %v1438, 96
      %v1481 = vpop.permute.xlu0 %1480
      %1482 = vrot.lane.b32.xlu0 %v1439, 96
      %v1483 = vpop.permute.xlu0 %1482
      %1484 = vrot.lane.b32.xlu0 %v1440, 96
      %v1485 = vpop.permute.xlu0 %1484
      %1486 = vrot.lane.b32.xlu0 %v1441, 96
      %v1487 = vpop.permute.xlu0 %1486
      %1488 = vrot.lane.b32.xlu0 %v1442, 96
      %v1489 = vpop.permute.xlu0 %1488
      %1490 = vrot.lane.b32.xlu0 %v1443, 96
      %v1491 = vpop.permute.xlu0 %1490
      %v1508 = vadd.f32 %v1017, %v1461
      %v1509 = vadd.f32 %v1018, %v1463
      %v1510 = vadd.f32 %v1019, %v1465
      %v1511 = vadd.f32 %v1020, %v1467
      %v1512 = vadd.f32 %v1021, %v1469
      %v1513 = vadd.f32 %v1022, %v1471
      %v1514 = vadd.f32 %v1023, %v1473
      %v1515 = vadd.f32 %v1024, %v1475
      %v1516 = vadd.f32 %v1025, %v1477
      %v1517 = vadd.f32 %v1026, %v1479
      %v1518 = vadd.f32 %v1027, %v1481
      %v1519 = vadd.f32 %v1028, %v1483
      %v1520 = vadd.f32 %v1029, %v1485
      %v1521 = vadd.f32 %v1030, %v1487
      %v1522 = vadd.f32 %v1031, %v1489
      %v1523 = vadd.f32 %v1032, %v1491
      %v1524 = vld [vmem:[%s3 + $0x6] sm:$0x1]
      %v1525 = vld [vmem:[%s3 + $0x7] sm:$0x1]
      %v1526 = vsel %vm463, %v1508, 0.0
      %1527 = vadd.xlane.f32.xlu0 %v1526
      %v1528 = vpop.xlane.xlu0 %1527
      %v1529 = vsel %vm463, %v1509, 0.0
      %1530 = vadd.xlane.f32.xlu0 %v1529
      %v1531 = vpop.xlane.xlu0 %1530
      %v1532 = vsel %vm463, %v1510, 0.0
      %1533 = vadd.xlane.f32.xlu0 %v1532
      %v1534 = vpop.xlane.xlu0 %1533
      %v1535 = vsel %vm463, %v1511, 0.0
      %1536 = vadd.xlane.f32.xlu0 %v1535
      %v1537 = vpop.xlane.xlu0 %1536
      %v1538 = vsel %vm463, %v1512, 0.0
      %1539 = vadd.xlane.f32.xlu0 %v1538
      %v1540 = vpop.xlane.xlu0 %1539
      %v1541 = vsel %vm463, %v1513, 0.0
      %1542 = vadd.xlane.f32.xlu0 %v1541
      %v1543 = vpop.xlane.xlu0 %1542
      %v1544 = vsel %vm463, %v1514, 0.0
      %1545 = vadd.xlane.f32.xlu0 %v1544
      %v1546 = vpop.xlane.xlu0 %1545
      %v1547 = vsel %vm463, %v1515, 0.0
      %1548 = vadd.xlane.f32.xlu0 %v1547
      %v1549 = vpop.xlane.xlu0 %1548
      %v1550 = vsel %vm463, %v1516, 0.0
      %1551 = vadd.xlane.f32.xlu0 %v1550
      %v1552 = vpop.xlane.xlu0 %1551
      %v1553 = vsel %vm463, %v1517, 0.0
      %1554 = vadd.xlane.f32.xlu0 %v1553
      %v1555 = vpop.xlane.xlu0 %1554
      %v1556 = vsel %vm463, %v1518, 0.0
      %1557 = vadd.xlane.f32.xlu0 %v1556
      %v1558 = vpop.xlane.xlu0 %1557
      %v1559 = vsel %vm463, %v1519, 0.0
      %1560 = vadd.xlane.f32.xlu0 %v1559
      %v1561 = vpop.xlane.xlu0 %1560
      %v1562 = vsel %vm463, %v1520, 0.0
      %1563 = vadd.xlane.f32.xlu0 %v1562
      %v1564 = vpop.xlane.xlu0 %1563
      %v1565 = vsel %vm463, %v1521, 0.0
      %1566 = vadd.xlane.f32.xlu0 %v1565
      %v1567 = vpop.xlane.xlu0 %1566
      %v1568 = vsel %vm463, %v1522, 0.0
      %1569 = vadd.xlane.f32.xlu0 %v1568
      %v1570 = vpop.xlane.xlu0 %1569
      %v1571 = vsel %vm463, %v1523, 0.0
      %1572 = vadd.xlane.f32.xlu0 %v1571
      %v1573 = vpop.xlane.xlu0 %1572
      %v1574 = vmul.f32 %v1528, %v832
      %v1575 = vmul.f32 %v1531, %v832
      %v1576 = vmul.f32 %v1534, %v832
      %v1577 = vmul.f32 %v1537, %v832
      %v1578 = vmul.f32 %v1540, %v832
      %v1579 = vmul.f32 %v1543, %v832
      %v1580 = vmul.f32 %v1546, %v832
      %v1581 = vmul.f32 %v1549, %v832
      %v1582 = vmul.f32 %v1552, %v832
      %v1583 = vmul.f32 %v1555, %v832
      %v1584 = vmul.f32 %v1558, %v832
      %v1585 = vmul.f32 %v1561, %v832
      %v1586 = vmul.f32 %v1564, %v832
      %v1587 = vmul.f32 %v1567, %v832
      %v1588 = vmul.f32 %v1570, %v832
      %v1589 = vmul.f32 %v1573, %v832
      %v1590 = vsub.f32 %v1508, %v1574
      %v1591 = vsub.f32 %v1509, %v1575
      %v1592 = vsub.f32 %v1510, %v1576
      %v1593 = vsub.f32 %v1511, %v1577
      %v1594 = vsub.f32 %v1512, %v1578
      %v1595 = vsub.f32 %v1513, %v1579
      %v1596 = vsub.f32 %v1514, %v1580
      %v1597 = vsub.f32 %v1515, %v1581
      %v1598 = vsub.f32 %v1516, %v1582
      %v1599 = vsub.f32 %v1517, %v1583
      %v1600 = vsub.f32 %v1518, %v1584
      %v1601 = vsub.f32 %v1519, %v1585
      %v1602 = vsub.f32 %v1520, %v1586
      %v1603 = vsub.f32 %v1521, %v1587
      %v1604 = vsub.f32 %v1522, %v1588
      %v1605 = vsub.f32 %v1523, %v1589
      %v1606 = vmul.f32 %v1590, %v1590
      %v1607 = vmul.f32 %v1591, %v1591
      %v1608 = vmul.f32 %v1592, %v1592
      %v1609 = vmul.f32 %v1593, %v1593
      %v1610 = vmul.f32 %v1594, %v1594
      %v1611 = vmul.f32 %v1595, %v1595
      %v1612 = vmul.f32 %v1596, %v1596
      %v1613 = vmul.f32 %v1597, %v1597
      %v1614 = vmul.f32 %v1598, %v1598
      %v1615 = vmul.f32 %v1599, %v1599
      %v1616 = vmul.f32 %v1600, %v1600
      %v1617 = vmul.f32 %v1601, %v1601
      %v1618 = vmul.f32 %v1602, %v1602
      %v1619 = vmul.f32 %v1603, %v1603
      %v1620 = vmul.f32 %v1604, %v1604
      %v1621 = vmul.f32 %v1605, %v1605
      %v1622 = vsel %vm463, %v1606, 0.0
      %1623 = vadd.xlane.f32.xlu0 %v1622
      %v1624 = vpop.xlane.xlu0 %1623
      %v1625 = vsel %vm463, %v1607, 0.0
      %1626 = vadd.xlane.f32.xlu0 %v1625
      %v1627 = vpop.xlane.xlu0 %1626
      %v1628 = vsel %vm463, %v1608, 0.0
      %1629 = vadd.xlane.f32.xlu0 %v1628
      %v1630 = vpop.xlane.xlu0 %1629
      %v1631 = vsel %vm463, %v1609, 0.0
      %1632 = vadd.xlane.f32.xlu0 %v1631
      %v1633 = vpop.xlane.xlu0 %1632
      %v1634 = vsel %vm463, %v1610, 0.0
      %1635 = vadd.xlane.f32.xlu0 %v1634
      %v1636 = vpop.xlane.xlu0 %1635
      %v1637 = vsel %vm463, %v1611, 0.0
      %1638 = vadd.xlane.f32.xlu0 %v1637
      %v1639 = vpop.xlane.xlu0 %1638
      %v1640 = vsel %vm463, %v1612, 0.0
      %1641 = vadd.xlane.f32.xlu0 %v1640
      %v1642 = vpop.xlane.xlu0 %1641
      %v1643 = vsel %vm463, %v1613, 0.0
      %1644 = vadd.xlane.f32.xlu0 %v1643
      %v1645 = vpop.xlane.xlu0 %1644
      %v1646 = vsel %vm463, %v1614, 0.0
      %1647 = vadd.xlane.f32.xlu0 %v1646
      %v1648 = vpop.xlane.xlu0 %1647
      %v1649 = vsel %vm463, %v1615, 0.0
      %1650 = vadd.xlane.f32.xlu0 %v1649
      %v1651 = vpop.xlane.xlu0 %1650
      %v1652 = vsel %vm463, %v1616, 0.0
      %1653 = vadd.xlane.f32.xlu0 %v1652
      %v1654 = vpop.xlane.xlu0 %1653
      %v1655 = vsel %vm463, %v1617, 0.0
      %1656 = vadd.xlane.f32.xlu0 %v1655
      %v1657 = vpop.xlane.xlu0 %1656
      %v1658 = vsel %vm463, %v1618, 0.0
      %1659 = vadd.xlane.f32.xlu0 %v1658
      %v1660 = vpop.xlane.xlu0 %1659
      %v1661 = vsel %vm463, %v1619, 0.0
      %1662 = vadd.xlane.f32.xlu0 %v1661
      %v1663 = vpop.xlane.xlu0 %1662
      %v1664 = vsel %vm463, %v1620, 0.0
      %1665 = vadd.xlane.f32.xlu0 %v1664
      %v1666 = vpop.xlane.xlu0 %1665
      %v1667 = vsel %vm463, %v1621, 0.0
      %1668 = vadd.xlane.f32.xlu0 %v1667
      %v1669 = vpop.xlane.xlu0 %1668
      %v1670 = vmul.f32 %v1624, %v832
      %v1671 = vmul.f32 %v1627, %v832
      %v1672 = vmul.f32 %v1630, %v832
      %v1673 = vmul.f32 %v1633, %v832
      %v1674 = vmul.f32 %v1636, %v832
      %v1675 = vmul.f32 %v1639, %v832
      %v1676 = vmul.f32 %v1642, %v832
      %v1677 = vmul.f32 %v1645, %v832
      %v1678 = vmul.f32 %v1648, %v832
      %v1679 = vmul.f32 %v1651, %v832
      %v1680 = vmul.f32 %v1654, %v832
      %v1681 = vmul.f32 %v1657, %v832
      %v1682 = vmul.f32 %v1660, %v832
      %v1683 = vmul.f32 %v1663, %v832
      %v1684 = vmul.f32 %v1666, %v832
      %v1685 = vmul.f32 %v1669, %v832
      %v1686 = vadd.f32 %v1670, 1e-05
      %v1687 = vadd.f32 %v1671, 1e-05
      %v1688 = vadd.f32 %v1672, 1e-05
      %v1689 = vadd.f32 %v1673, 1e-05
      %v1690 = vadd.f32 %v1674, 1e-05
      %v1691 = vadd.f32 %v1675, 1e-05
      %v1692 = vadd.f32 %v1676, 1e-05
      %v1693 = vadd.f32 %v1677, 1e-05
      %v1694 = vadd.f32 %v1678, 1e-05
      %v1695 = vadd.f32 %v1679, 1e-05
      %v1696 = vadd.f32 %v1680, 1e-05
      %v1697 = vadd.f32 %v1681, 1e-05
      %v1698 = vadd.f32 %v1682, 1e-05
      %v1699 = vadd.f32 %v1683, 1e-05
      %v1700 = vadd.f32 %v1684, 1e-05
      %v1701 = vadd.f32 %v1685, 1e-05
      %v1702 = vrsqrt.pop %v1686
      %v1703 = vrsqrt.pop %v1687
      %v1704 = vrsqrt.pop %v1688
      %v1705 = vrsqrt.pop %v1689
      %v1706 = vrsqrt.pop %v1690
      %v1707 = vrsqrt.pop %v1691
      %v1708 = vrsqrt.pop %v1692
      %v1709 = vrsqrt.pop %v1693
      %v1710 = vrsqrt.pop %v1694
      %v1711 = vrsqrt.pop %v1695
      %v1712 = vrsqrt.pop %v1696
      %v1713 = vrsqrt.pop %v1697
      %v1714 = vrsqrt.pop %v1698
      %v1715 = vrsqrt.pop %v1699
      %v1716 = vrsqrt.pop %v1700
      %v1717 = vrsqrt.pop %v1701
      %v1718 = vmul.f32 %v1590, %v1702
      %v1719 = vmul.f32 %v1591, %v1703
      %v1720 = vmul.f32 %v1592, %v1704
      %v1721 = vmul.f32 %v1593, %v1705
      %v1722 = vmul.f32 %v1594, %v1706
      %v1723 = vmul.f32 %v1595, %v1707
      %v1724 = vmul.f32 %v1596, %v1708
      %v1725 = vmul.f32 %v1597, %v1709
      %v1726 = vmul.f32 %v1598, %v1710
      %v1727 = vmul.f32 %v1599, %v1711
      %v1728 = vmul.f32 %v1600, %v1712
      %v1729 = vmul.f32 %v1601, %v1713
      %v1730 = vmul.f32 %v1602, %v1714
      %v1731 = vmul.f32 %v1603, %v1715
      %v1732 = vmul.f32 %v1604, %v1716
      %v1733 = vmul.f32 %v1605, %v1717
      %v1734 = vlaneseq
      %v1735 = vshrl.u32 %v1734, 7
      %v1736 = vsub.s32 0, %v1735
      %v1737 = vrot.slane %v1524, %v1736
      %v1738 = vmul.f32 %v1718, %v1737
      %v1739 = vmul.f32 %v1719, %v1737
      %v1740 = vmul.f32 %v1720, %v1737
      %v1741 = vmul.f32 %v1721, %v1737
      %v1742 = vmul.f32 %v1722, %v1737
      %v1743 = vmul.f32 %v1723, %v1737
      %v1744 = vmul.f32 %v1724, %v1737
      %v1745 = vmul.f32 %v1725, %v1737
      %v1746 = vmul.f32 %v1726, %v1737
      %v1747 = vmul.f32 %v1727, %v1737
      %v1748 = vmul.f32 %v1728, %v1737
      %v1749 = vmul.f32 %v1729, %v1737
      %v1750 = vmul.f32 %v1730, %v1737
      %v1751 = vmul.f32 %v1731, %v1737
      %v1752 = vmul.f32 %v1732, %v1737
      %v1753 = vmul.f32 %v1733, %v1737
      %v1754 = vlaneseq
      %v1755 = vshrl.u32 %v1754, 7
      %v1756 = vsub.s32 0, %v1755
      %v1757 = vrot.slane %v1525, %v1756
      %v1758 = vadd.f32 %v1738, %v1757
      %v1759 = vadd.f32 %v1739, %v1757
      %v1760 = vadd.f32 %v1740, %v1757
      %v1761 = vadd.f32 %v1741, %v1757
      %v1762 = vadd.f32 %v1742, %v1757
      %v1763 = vadd.f32 %v1743, %v1757
      %v1764 = vadd.f32 %v1744, %v1757
      %v1765 = vadd.f32 %v1745, %v1757
      %v1766 = vadd.f32 %v1746, %v1757
      %v1767 = vadd.f32 %v1747, %v1757
      %v1768 = vadd.f32 %v1748, %v1757
      %v1769 = vadd.f32 %v1749, %v1757
      %v1770 = vadd.f32 %v1750, %v1757
      %v1771 = vadd.f32 %v1751, %v1757
      %v1772 = vadd.f32 %v1752, %v1757
      %v1773 = vadd.f32 %v1753, %v1757
      %1774 = vst.msk [vmem:[%s235] sm:$0xff] %vm463, %v1758
      %1775 = vst.msk [vmem:[%s235 + $0x8] sm:$0xff] %vm463, %v1759
      %1776 = vst.msk [vmem:[%s235 + $0x10] sm:$0xff] %vm463, %v1760
      %1777 = vst.msk [vmem:[%s235 + $0x18] sm:$0xff] %vm463, %v1761
      %1778 = vst.msk [vmem:[%s235 + $0x20] sm:$0xff] %vm463, %v1762
      %1779 = vst.msk [vmem:[%s235 + $0x28] sm:$0xff] %vm463, %v1763
      %1780 = vst.msk [vmem:[%s235 + $0x30] sm:$0xff] %vm463, %v1764
      %1781 = vst.msk [vmem:[%s235 + $0x38] sm:$0xff] %vm463, %v1765
      %1782 = vst.msk [vmem:[%s235 + $0x40] sm:$0xff] %vm463, %v1766
      %1783 = vst.msk [vmem:[%s235 + $0x48] sm:$0xff] %vm463, %v1767
      %1784 = vst.msk [vmem:[%s235 + $0x50] sm:$0xff] %vm463, %v1768
      %1785 = vst.msk [vmem:[%s235 + $0x58] sm:$0xff] %vm463, %v1769
      %1786 = vst.msk [vmem:[%s235 + $0x60] sm:$0xff] %vm463, %v1770
      %1787 = vst.msk [vmem:[%s235 + $0x68] sm:$0xff] %vm463, %v1771
      %1788 = vst.msk [vmem:[%s235 + $0x70] sm:$0xff] %vm463, %v1772
      %1789 = vst.msk [vmem:[%s235 + $0x78] sm:$0xff] %vm463, %v1773
      %s1790 = smul.u32 16, %s15
      %p1791 = scmp.lt.s32.totalorder %s1790, 31
      %s1792 = scalar_select %p1791, %s1790, 31
      %s1793 = smul.addr %s1792, 8
      %s1794 = scalar_lea.vmem %s4, %s1793
      // Predicated region
      $region37: #{tpu_custom_call.1} parent=35 // pred_check
        %p1795 = pneg %p131
      $region38: #{tpu_custom_call.1} parent=35 // pred_check_branch
        %1797 = sbr.rel (%p1795) target = $region40
      $region39: #{tpu_custom_call.1} parent=35 // pred_region
        %s1798 = smul.u32 16, %s15
      $region40: #{tpu_custom_call.1} parent=35 // pred_fallthru
        _
    $region36: #{tpu_custom_call.1} parent=5 // pred_fallthru
      _
    %p1799 = scmp.le.s32.totalorder 2, %s10
    // Predicated region
    $region41: #{tpu_custom_call.1} parent=5 // pred_check
      %p1800 = pneg %p1799
    $region42: #{tpu_custom_call.1} parent=5 // pred_check_branch
      %1802 = sbr.rel (%p1800) target = $region44
    $region43: #{tpu_custom_call.1} parent=5 // pred_region
      %s1803 = ssub.s32 %s10, 2
      // Predicated region
      $region45: #{tpu_custom_call.1} parent=43 // pred_check
        %p1804 = pneg %p137
      $region46: #{tpu_custom_call.1} parent=43 // pred_check_branch
        %1806 = sbr.rel (%p1804) target = $region48
      $region47: #{tpu_custom_call.1} parent=43 // pred_region
        %s1807 = smul.u32 16, %s16
        %p1808 = scmp.lt.s32.totalorder %s1807, 31
        %s1809 = scalar_select %p1808, %s1807, 31
        %s1810 = smul.addr %s1809, 8
        %s1811 = scalar_lea.vmem %s4, %s1810
      $region48: #{tpu_custom_call.1} parent=43 // pred_fallthru
        _
    $region44: #{tpu_custom_call.1} parent=5 // pred_fallthru
      _
  $region6: #{tpu_custom_call.1} parent=0 // loop_footer
    %s14 = sadd.s32 1, %s10
  $region7: #{tpu_custom_call.1} parent=0 // loop_footer_branch
    %9 = sbr.rel target = $region3
  $region8: #{tpu_custom_call.1} parent=0 // loop_exit
    _

</llo_original>
